<compile_context>
chip_gen: v7x
topology: tpu7x:2x2x1
jax: 0.10.0
libtpu: 0.0.40
codegen_flags: <defaults>
</compile_context>

<pallas_src>
import functools

import jax
import jax.numpy as jnp
from jax import lax
from jax.experimental import pallas as pl
from jax.experimental.pallas import tpu as pltpu


def lka_kernel(x_ref, w1_ref, b1_ref, w2_ref, b2_ref, wpw_ref, bpw_ref,
               out_ref, pad1, pad2, *, matmul_dtype):
    # x_ref:   (1, H, W, Cp)   current batch element, channels on lanes
    # w1_ref:  (5, 5, Cp)   b1_ref: (1, Cp)   depthwise 5x5
    # w2_ref:  (7, 7, Cp)   b2_ref: (1, Cp)   depthwise 7x7, dilation 3
    # wpw_ref: (Cp, Cp)     bpw_ref:(1, Cp)   pointwise 1x1 as (C_in, C_out)
    # pad1:    VMEM (H+4,  W+4,  Cp) scratch (zero halo, pad=2)
    # pad2:    VMEM (H+18, W+18, Cp) scratch (zero halo, pad=9)
    _, H, W, Cp = x_ref.shape
    P1, P2 = 2, 9

    x = x_ref[0]                                          # (H, W, Cp)

    # ---- pad1: zero only the 2-wide halo ring (interior overwritten below) --
    zrow1 = jnp.zeros((P1, W + 2 * P1, Cp), jnp.float32)
    zcol1 = jnp.zeros((H, P1, Cp), jnp.float32)
    pad1[0:P1, :, :] = zrow1
    pad1[P1 + H:2 * P1 + H, :, :] = zrow1
    pad1[P1:P1 + H, 0:P1, :] = zcol1
    pad1[P1:P1 + H, P1 + W:2 * P1 + W, :] = zcol1
    # Lane-aligned interior write (full Cp lanes).
    pad1[P1:P1 + H, P1:P1 + W, :] = x

    def depthwise(pad_ref, w_ref, b_ref, ksize, dil):
        acc0 = jnp.broadcast_to(b_ref[...].reshape(1, 1, Cp), (H, W, Cp))

        def row(kh, acc):
            w_row = w_ref[kh]                             # (ksize, Cp), hoisted per kh
            base = dil * kh
            for kw in range(ksize):                       # unrolled taps
                tap = pad_ref[pl.ds(base, H), dil * kw:dil * kw + W, :]
                acc = acc + w_row[kw:kw + 1, :].reshape(1, 1, Cp) * tap
            return acc

        return lax.fori_loop(0, ksize, row, acc0)

    # ---- depthwise 5x5, padding 2 ----
    acc1 = depthwise(pad1, w1_ref, b1_ref, 5, 1)

    # ---- pad2: zero only the 9-wide halo ring; interior <- acc1 ----
    zrow2 = jnp.zeros((P2, W + 2 * P2, Cp), jnp.float32)
    zcol2 = jnp.zeros((H, P2, Cp), jnp.float32)
    pad2[0:P2, :, :] = zrow2
    pad2[P2 + H:2 * P2 + H, :, :] = zrow2
    pad2[P2:P2 + H, 0:P2, :] = zcol2
    pad2[P2:P2 + H, P2 + W:2 * P2 + W, :] = zcol2
    pad2[P2:P2 + H, P2:P2 + W, :] = acc1

    # ---- depthwise 7x7, dilation 3, padding 9 ----
    acc2 = depthwise(pad2, w2_ref, b2_ref, 7, 3)

    # ---- pointwise 1x1: tall-M, lane-dense (H*W, Cp) @ (Cp, Cp) on the MXU --
    lhs = acc2.reshape(H * W, Cp).astype(matmul_dtype)
    rhs = wpw_ref[...].astype(matmul_dtype)
    wgt = jnp.dot(lhs, rhs, preferred_element_type=jnp.float32)   # (H*W, Cp) f32
    wgt = wgt + bpw_ref[...]                                      # (1, Cp) bias

    # ---- attention: x * weight (layouts match; lane-dense unmasked store) ---
    out_ref[0] = (x * wgt.reshape(H, W, Cp)).astype(out_ref.dtype)


def _round_up(v, m):
    return ((v + m - 1) // m) * m


def large_kernel_attn(x, w_dw, b_dw, w_dwd, b_dwd, w_pw, b_pw,
                      *, matmul_dtype=jnp.bfloat16):
    """x: (N, C, H, W) float32.  Weights in PyTorch conv layouts.

    matmul_dtype: operand dtype fed to the MXU for the 1x1 conv (accumulation
    is always f32).  Use jnp.float32 for bit-tight numerics.
    """
    N, C, H, W = x.shape
    Cp = _round_up(C, 128)                   # channels on lanes, lane-dense
    pc = Cp - C

    # ---- Repack to channels-last, lane-padded layouts (plain-JAX glue) ----
    x_p = jnp.pad(jnp.transpose(x, (0, 2, 3, 1)), ((0, 0),) * 3 + ((0, pc),))
    w1_k = jnp.pad(jnp.transpose(w_dw[:, 0], (1, 2, 0)),
                   ((0, 0), (0, 0), (0, pc)))                  # (5, 5, Cp)
    w2_k = jnp.pad(jnp.transpose(w_dwd[:, 0], (1, 2, 0)),
                   ((0, 0), (0, 0), (0, pc)))                  # (7, 7, Cp)
    wpw_k = jnp.pad(jnp.transpose(w_pw[:, :, 0, 0], (1, 0)),
                    ((0, pc), (0, pc)))                        # (C_in, C_out) padded
    b1_k = jnp.pad(b_dw, (0, pc)).reshape(1, Cp)
    b2_k = jnp.pad(b_dwd, (0, pc)).reshape(1, Cp)
    bpw_k = jnp.pad(b_pw, (0, pc)).reshape(1, Cp)

    # ---- Explicit VMEM budget (scratch + double-buffered blocks + temps) ----
    f32b = 4
    est = f32b * (
        (H + 4) * (W + 4) * Cp + (H + 18) * (W + 18) * Cp    # padded scratch
        + 2 * 2 * H * W * Cp                                 # in/out blocks, 2x buffered
        + 4 * H * W * Cp                                     # live accumulators / temps
        + (25 + 49 + Cp + 3) * Cp)                           # weights + biases
    vmem_limit = int(min(max(2 * est, 32 * 1024 * 1024), 48 * 1024 * 1024))

    kernel = functools.partial(lka_kernel, matmul_dtype=matmul_dtype)

    out_p = pl.pallas_call(
        kernel,
        out_shape=jax.ShapeDtypeStruct((N, H, W, Cp), x.dtype),
        grid_spec=pltpu.PrefetchScalarGridSpec(
            num_scalar_prefetch=0,
            grid=(N,),
            in_specs=[
                pl.BlockSpec((1, H, W, Cp), lambda n: (n, 0, 0, 0)),
                pl.BlockSpec((5, 5, Cp), lambda n: (0, 0, 0)),
                pl.BlockSpec((1, Cp), lambda n: (0, 0)),
                pl.BlockSpec((7, 7, Cp), lambda n: (0, 0, 0)),
                pl.BlockSpec((1, Cp), lambda n: (0, 0)),
                pl.BlockSpec((Cp, Cp), lambda n: (0, 0)),
                pl.BlockSpec((1, Cp), lambda n: (0, 0)),
            ],
            out_specs=pl.BlockSpec((1, H, W, Cp), lambda n: (n, 0, 0, 0)),
            scratch_shapes=[
                pltpu.VMEM((H + 4, W + 4, Cp), jnp.float32),
                pltpu.VMEM((H + 18, W + 18, Cp), jnp.float32),
            ],
        ),
        compiler_params=pltpu.CompilerParams(
            dimension_semantics=("parallel",),
            vmem_limit_bytes=vmem_limit),
    )(x_p, w1_k, b1_k, w2_k, b2_k, wpw_k, bpw_k)

    # Drop channel padding, back to NCHW.
    return jnp.transpose(out_p[:, :, :, :C], (0, 3, 1, 2))


def reference_forward(x, w_dw, b_dw, w_dwd, b_dwd, w_pw, b_pw):
    """Pure-JAX reference matching the PyTorch module exactly."""
    C = x.shape[1]
    dn = ("NCHW", "OIHW", "NCHW")
    y = lax.conv_general_dilated(
        x, w_dw, (1, 1), ((2, 2), (2, 2)),
        dimension_numbers=dn, feature_group_count=C) + b_dw[None, :, None, None]
    y = lax.conv_general_dilated(
        y, w_dwd, (1, 1), ((9, 9), (9, 9)), rhs_dilation=(3, 3),
        dimension_numbers=dn, feature_group_count=C) + b_dwd[None, :, None, None]
    y = lax.conv_general_dilated(
        y, w_pw, (1, 1), ((0, 0), (0, 0)),
        dimension_numbers=dn) + b_pw[None, :, None, None]
    return x * y


if __name__ == "__main__":
    N, C, H, W = 2, 8, 16, 16

    key = jax.random.PRNGKey(0)
    ks = jax.random.split(key, 7)
    x = jax.random.normal(ks[0], (N, C, H, W), dtype=jnp.float32)

    # Deterministic, PyTorch-shaped parameters (synthetic init).
    w_dw = jax.random.normal(ks[1], (C, 1, 5, 5), dtype=jnp.float32) * 0.1
    b_dw = jax.random.normal(ks[2], (C,), dtype=jnp.float32) * 0.1
    w_dwd = jax.random.normal(ks[3], (C, 1, 7, 7), dtype=jnp.float32) * 0.1
    b_dwd = jax.random.normal(ks[4], (C,), dtype=jnp.float32) * 0.1
    w_pw = jax.random.normal(ks[5], (C, C, 1, 1), dtype=jnp.float32) * 0.1
    b_pw = jax.random.normal(ks[6], (C,), dtype=jnp.float32) * 0.1

    ref = jax.block_until_ready(
        reference_forward(x, w_dw, b_dw, w_dwd, b_dwd, w_pw, b_pw))

    # Bit-tight path (f32 MXU operands): must match the f32 reference closely.
    out_f32 = jax.block_until_ready(
        large_kernel_attn(x, w_dw, b_dw, w_dwd, b_dwd, w_pw, b_pw,
                          matmul_dtype=jnp.float32))
    assert out_f32.shape == (N, C, H, W) and out_f32.dtype == jnp.float32
    assert jnp.allclose(out_f32, ref, rtol=1e-4, atol=1e-4), \
        f"f32 path: max abs err = {jnp.max(jnp.abs(out_f32 - ref))}"

    # Default fast path (bf16 MXU operands, f32 accumulation).
    out = jax.block_until_ready(
        large_kernel_attn(x, w_dw, b_dw, w_dwd, b_dwd, w_pw, b_pw))
    assert out.shape == (N, C, H, W) and out.dtype == jnp.float32
    rel = (jnp.linalg.norm((out - ref).ravel()) /
           (jnp.linalg.norm(ref.ravel()) + 1e-12))
    assert rel < 2e-2, f"bf16-matmul path: relative L2 err = {rel}"

    print("KERNEL_OK")
</pallas_src>

<mosaic_0001>
module attributes {stable_mosaic.version = 11 : i64} {
  func.func @lka_kernel(%arg0: i32, %arg1: memref<1x16x16x128xf32, #tpu.memory_space<vmem>>, %arg2: memref<5x5x128xf32, #tpu.memory_space<vmem>>, %arg3: memref<1x128xf32, #tpu.memory_space<vmem>>, %arg4: memref<7x7x128xf32, #tpu.memory_space<vmem>>, %arg5: memref<1x128xf32, #tpu.memory_space<vmem>>, %arg6: memref<128x128xf32, #tpu.memory_space<vmem>>, %arg7: memref<1x128xf32, #tpu.memory_space<vmem>>, %arg8: memref<1x16x16x128xf32, #tpu.memory_space<vmem>>, %arg9: memref<20x20x128xf32, #tpu.memory_space<vmem>>, %arg10: memref<34x34x128xf32, #tpu.memory_space<vmem>>) attributes {dimension_semantics = [#tpu.dimension_semantics<parallel>], iteration_bounds = array<i64: 2>, scalar_prefetch = 0 : i64, scratch_operands = 2 : i64, tpu.core_type = #tpu.core_type<tc>, window_params = [{transform_indices = @transform_0, window_bounds = array<i64: 1, 16, 16, 128>}, {pipeline_mode = #tpu.pipeline_mode<synchronous>, transform_indices = @transform_1, window_bounds = array<i64: 5, 5, 128>}, {pipeline_mode = #tpu.pipeline_mode<synchronous>, transform_indices = @transform_2, window_bounds = array<i64: 1, 128>}, {pipeline_mode = #tpu.pipeline_mode<synchronous>, transform_indices = @transform_3, window_bounds = array<i64: 7, 7, 128>}, {pipeline_mode = #tpu.pipeline_mode<synchronous>, transform_indices = @transform_4, window_bounds = array<i64: 1, 128>}, {pipeline_mode = #tpu.pipeline_mode<synchronous>, transform_indices = @transform_5, window_bounds = array<i64: 128, 128>}, {pipeline_mode = #tpu.pipeline_mode<synchronous>, transform_indices = @transform_6, window_bounds = array<i64: 1, 128>}, {transform_indices = @transform_7, window_bounds = array<i64: 1, 16, 16, 128>}]} {
    %c0 = arith.constant 0 : index
    %c0_0 = arith.constant 0 : index
    %c0_1 = arith.constant 0 : index
    %c0_2 = arith.constant 0 : index
    %0 = vector.load %arg1[%c0, %c0_0, %c0_1, %c0_2] : memref<1x16x16x128xf32, #tpu.memory_space<vmem>>, vector<1x16x16x128xf32>
    %1 = vector.shape_cast %0 : vector<1x16x16x128xf32> to vector<16x16x128xf32>
    %cst = arith.constant 0.000000e+00 : f32
    %2 = vector.broadcast %cst : f32 to vector<2x20x128xf32>
    %cst_3 = arith.constant 0.000000e+00 : f32
    %3 = vector.broadcast %cst_3 : f32 to vector<16x2x128xf32>
    %c0_4 = arith.constant 0 : index
    %c0_5 = arith.constant 0 : index
    %c0_6 = arith.constant 0 : index
    %4 = vector.load %arg9[%c0_4, %c0_5, %c0_6] : memref<20x20x128xf32, #tpu.memory_space<vmem>>, vector<2x20x128xf32>
    tpu.vector_store %arg9[%c0_4, %c0_5, %c0_6], %2 {strides = array<i32>} : memref<20x20x128xf32, #tpu.memory_space<vmem>>, vector<2x20x128xf32>,
    %c18 = arith.constant 18 : index
    %c0_7 = arith.constant 0 : index
    %c0_8 = arith.constant 0 : index
    %5 = vector.load %arg9[%c18, %c0_7, %c0_8] : memref<20x20x128xf32, #tpu.memory_space<vmem>>, vector<2x20x128xf32>
    tpu.vector_store %arg9[%c18, %c0_7, %c0_8], %2 {strides = array<i32>} : memref<20x20x128xf32, #tpu.memory_space<vmem>>, vector<2x20x128xf32>,
    %c2 = arith.constant 2 : index
    %c0_9 = arith.constant 0 : index
    %c0_10 = arith.constant 0 : index
    %6 = vector.load %arg9[%c2, %c0_9, %c0_10] : memref<20x20x128xf32, #tpu.memory_space<vmem>>, vector<16x2x128xf32>
    tpu.vector_store %arg9[%c2, %c0_9, %c0_10], %3 {strides = array<i32>} : memref<20x20x128xf32, #tpu.memory_space<vmem>>, vector<16x2x128xf32>,
    %c2_11 = arith.constant 2 : index
    %c18_12 = arith.constant 18 : index
    %c0_13 = arith.constant 0 : index
    %7 = vector.load %arg9[%c2_11, %c18_12, %c0_13] : memref<20x20x128xf32, #tpu.memory_space<vmem>>, vector<16x2x128xf32>
    tpu.vector_store %arg9[%c2_11, %c18_12, %c0_13], %3 {strides = array<i32>} : memref<20x20x128xf32, #tpu.memory_space<vmem>>, vector<16x2x128xf32>,
    %c2_14 = arith.constant 2 : index
    %c2_15 = arith.constant 2 : index
    %c0_16 = arith.constant 0 : index
    %8 = vector.load %arg9[%c2_14, %c2_15, %c0_16] : memref<20x20x128xf32, #tpu.memory_space<vmem>>, vector<16x16x128xf32>
    tpu.vector_store %arg9[%c2_14, %c2_15, %c0_16], %1 {strides = array<i32>} : memref<20x20x128xf32, #tpu.memory_space<vmem>>, vector<16x16x128xf32>,
    %c0_17 = arith.constant 0 : index
    %c0_18 = arith.constant 0 : index
    %9 = vector.load %arg3[%c0_17, %c0_18] : memref<1x128xf32, #tpu.memory_space<vmem>>, vector<1x128xf32>
    %10 = vector.shape_cast %9 : vector<1x128xf32> to vector<1x1x128xf32>
    %11 = vector.shape_cast %10 : vector<1x1x128xf32> to vector<1x1x128xf32>
    %12 = vector.broadcast %11 : vector<1x1x128xf32> to vector<16x16x128xf32>
    %c0_i32 = arith.constant 0 : i32
    %c5_i32 = arith.constant 5 : i32
    %13 = arith.addi %c0_i32, %c5_i32 : i32
    %c1_i32 = arith.constant 1 : i32
    %14 = scf.for %arg11 = %c0_i32 to %13 step %c1_i32 iter_args(%arg12 = %12) -> (vector<16x16x128xf32>)  : i32 {
      %39 = arith.index_cast %arg11 : i32 to index
      %c0_49 = arith.constant 0 : index
      %c0_50 = arith.constant 0 : index
      %40 = vector.load %arg2[%39, %c0_49, %c0_50] : memref<5x5x128xf32, #tpu.memory_space<vmem>>, vector<1x5x128xf32>
      %41 = vector.shape_cast %40 : vector<1x5x128xf32> to vector<5x128xf32>
      %c1_i32_51 = arith.constant 1 : i32
      %42 = arith.muli %c1_i32_51, %arg11 : i32
      %43 = arith.index_cast %42 : i32 to index
      %c0_52 = arith.constant 0 : index
      %c0_53 = arith.constant 0 : index
      %44 = vector.load %arg9[%43, %c0_52, %c0_53] : memref<20x20x128xf32, #tpu.memory_space<vmem>>, vector<16x16x128xf32>
      %45 = vector.extract_strided_slice %41 {offsets = [0, 0], sizes = [1, 128], strides = [1, 1]} : vector<5x128xf32> to vector<1x128xf32>
      %46 = vector.shape_cast %45 : vector<1x128xf32> to vector<1x1x128xf32>
      %47 = vector.broadcast %46 : vector<1x1x128xf32> to vector<16x16x128xf32>
      %48 = arith.mulf %47, %44 : vector<16x16x128xf32>
      %49 = arith.addf %arg12, %48 : vector<16x16x128xf32>
      %50 = arith.index_cast %42 : i32 to index
      %c1 = arith.constant 1 : index
      %c0_54 = arith.constant 0 : index
      %51 = vector.load %arg9[%50, %c1, %c0_54] : memref<20x20x128xf32, #tpu.memory_space<vmem>>, vector<16x16x128xf32>
      %52 = vector.extract_strided_slice %41 {offsets = [1, 0], sizes = [1, 128], strides = [1, 1]} : vector<5x128xf32> to vector<1x128xf32>
      %53 = vector.shape_cast %52 : vector<1x128xf32> to vector<1x1x128xf32>
      %54 = vector.broadcast %53 : vector<1x1x128xf32> to vector<16x16x128xf32>
      %55 = arith.mulf %54, %51 : vector<16x16x128xf32>
      %56 = arith.addf %49, %55 : vector<16x16x128xf32>
      %57 = arith.index_cast %42 : i32 to index
      %c2_55 = arith.constant 2 : index
      %c0_56 = arith.constant 0 : index
      %58 = vector.load %arg9[%57, %c2_55, %c0_56] : memref<20x20x128xf32, #tpu.memory_space<vmem>>, vector<16x16x128xf32>
      %59 = vector.extract_strided_slice %41 {offsets = [2, 0], sizes = [1, 128], strides = [1, 1]} : vector<5x128xf32> to vector<1x128xf32>
      %60 = vector.shape_cast %59 : vector<1x128xf32> to vector<1x1x128xf32>
      %61 = vector.broadcast %60 : vector<1x1x128xf32> to vector<16x16x128xf32>
      %62 = arith.mulf %61, %58 : vector<16x16x128xf32>
      %63 = arith.addf %56, %62 : vector<16x16x128xf32>
      %64 = arith.index_cast %42 : i32 to index
      %c3 = arith.constant 3 : index
      %c0_57 = arith.constant 0 : index
      %65 = vector.load %arg9[%64, %c3, %c0_57] : memref<20x20x128xf32, #tpu.memory_space<vmem>>, vector<16x16x128xf32>
      %66 = vector.extract_strided_slice %41 {offsets = [3, 0], sizes = [1, 128], strides = [1, 1]} : vector<5x128xf32> to vector<1x128xf32>
      %67 = vector.shape_cast %66 : vector<1x128xf32> to vector<1x1x128xf32>
      %68 = vector.broadcast %67 : vector<1x1x128xf32> to vector<16x16x128xf32>
      %69 = arith.mulf %68, %65 : vector<16x16x128xf32>
      %70 = arith.addf %63, %69 : vector<16x16x128xf32>
      %71 = arith.index_cast %42 : i32 to index
      %c4 = arith.constant 4 : index
      %c0_58 = arith.constant 0 : index
      %72 = vector.load %arg9[%71, %c4, %c0_58] : memref<20x20x128xf32, #tpu.memory_space<vmem>>, vector<16x16x128xf32>
      %73 = vector.extract_strided_slice %41 {offsets = [4, 0], sizes = [1, 128], strides = [1, 1]} : vector<5x128xf32> to vector<1x128xf32>
      %74 = vector.shape_cast %73 : vector<1x128xf32> to vector<1x1x128xf32>
      %75 = vector.broadcast %74 : vector<1x1x128xf32> to vector<16x16x128xf32>
      %76 = arith.mulf %75, %72 : vector<16x16x128xf32>
      %77 = arith.addf %70, %76 : vector<16x16x128xf32>
      scf.yield %77 : vector<16x16x128xf32>
    }
    %c5_i32_19 = arith.constant 5 : i32
    %cst_20 = arith.constant 0.000000e+00 : f32
    %15 = vector.broadcast %cst_20 : f32 to vector<9x34x128xf32>
    %cst_21 = arith.constant 0.000000e+00 : f32
    %16 = vector.broadcast %cst_21 : f32 to vector<16x9x128xf32>
    %c0_22 = arith.constant 0 : index
    %c0_23 = arith.constant 0 : index
    %c0_24 = arith.constant 0 : index
    %17 = vector.load %arg10[%c0_22, %c0_23, %c0_24] : memref<34x34x128xf32, #tpu.memory_space<vmem>>, vector<9x34x128xf32>
    tpu.vector_store %arg10[%c0_22, %c0_23, %c0_24], %15 {strides = array<i32>} : memref<34x34x128xf32, #tpu.memory_space<vmem>>, vector<9x34x128xf32>,
    %c25 = arith.constant 25 : index
    %c0_25 = arith.constant 0 : index
    %c0_26 = arith.constant 0 : index
    %18 = vector.load %arg10[%c25, %c0_25, %c0_26] : memref<34x34x128xf32, #tpu.memory_space<vmem>>, vector<9x34x128xf32>
    tpu.vector_store %arg10[%c25, %c0_25, %c0_26], %15 {strides = array<i32>} : memref<34x34x128xf32, #tpu.memory_space<vmem>>, vector<9x34x128xf32>,
    %c9 = arith.constant 9 : index
    %c0_27 = arith.constant 0 : index
    %c0_28 = arith.constant 0 : index
    %19 = vector.load %arg10[%c9, %c0_27, %c0_28] : memref<34x34x128xf32, #tpu.memory_space<vmem>>, vector<16x9x128xf32>
    tpu.vector_store %arg10[%c9, %c0_27, %c0_28], %16 {strides = array<i32>} : memref<34x34x128xf32, #tpu.memory_space<vmem>>, vector<16x9x128xf32>,
    %c9_29 = arith.constant 9 : index
    %c25_30 = arith.constant 25 : index
    %c0_31 = arith.constant 0 : index
    %20 = vector.load %arg10[%c9_29, %c25_30, %c0_31] : memref<34x34x128xf32, #tpu.memory_space<vmem>>, vector<16x9x128xf32>
    tpu.vector_store %arg10[%c9_29, %c25_30, %c0_31], %16 {strides = array<i32>} : memref<34x34x128xf32, #tpu.memory_space<vmem>>, vector<16x9x128xf32>,
    %c9_32 = arith.constant 9 : index
    %c9_33 = arith.constant 9 : index
    %c0_34 = arith.constant 0 : index
    %21 = vector.load %arg10[%c9_32, %c9_33, %c0_34] : memref<34x34x128xf32, #tpu.memory_space<vmem>>, vector<16x16x128xf32>
    tpu.vector_store %arg10[%c9_32, %c9_33, %c0_34], %14 {strides = array<i32>} : memref<34x34x128xf32, #tpu.memory_space<vmem>>, vector<16x16x128xf32>,
    %c0_35 = arith.constant 0 : index
    %c0_36 = arith.constant 0 : index
    %22 = vector.load %arg5[%c0_35, %c0_36] : memref<1x128xf32, #tpu.memory_space<vmem>>, vector<1x128xf32>
    %23 = vector.shape_cast %22 : vector<1x128xf32> to vector<1x1x128xf32>
    %24 = vector.shape_cast %23 : vector<1x1x128xf32> to vector<1x1x128xf32>
    %25 = vector.broadcast %24 : vector<1x1x128xf32> to vector<16x16x128xf32>
    %c0_i32_37 = arith.constant 0 : i32
    %c7_i32 = arith.constant 7 : i32
    %26 = arith.addi %c0_i32_37, %c7_i32 : i32
    %c1_i32_38 = arith.constant 1 : i32
    %27 = scf.for %arg11 = %c0_i32_37 to %26 step %c1_i32_38 iter_args(%arg12 = %25) -> (vector<16x16x128xf32>)  : i32 {
      %39 = arith.index_cast %arg11 : i32 to index
      %c0_49 = arith.constant 0 : index
      %c0_50 = arith.constant 0 : index
      %40 = vector.load %arg4[%39, %c0_49, %c0_50] : memref<7x7x128xf32, #tpu.memory_space<vmem>>, vector<1x7x128xf32>
      %41 = vector.shape_cast %40 : vector<1x7x128xf32> to vector<7x128xf32>
      %c3_i32 = arith.constant 3 : i32
      %42 = arith.muli %c3_i32, %arg11 : i32
      %43 = arith.index_cast %42 : i32 to index
      %c0_51 = arith.constant 0 : index
      %c0_52 = arith.constant 0 : index
      %44 = vector.load %arg10[%43, %c0_51, %c0_52] : memref<34x34x128xf32, #tpu.memory_space<vmem>>, vector<16x16x128xf32>
      %45 = vector.extract_strided_slice %41 {offsets = [0, 0], sizes = [1, 128], strides = [1, 1]} : vector<7x128xf32> to vector<1x128xf32>
      %46 = vector.shape_cast %45 : vector<1x128xf32> to vector<1x1x128xf32>
      %47 = vector.broadcast %46 : vector<1x1x128xf32> to vector<16x16x128xf32>
      %48 = arith.mulf %47, %44 : vector<16x16x128xf32>
      %49 = arith.addf %arg12, %48 : vector<16x16x128xf32>
      %50 = arith.index_cast %42 : i32 to index
      %c3 = arith.constant 3 : index
      %c0_53 = arith.constant 0 : index
      %51 = vector.load %arg10[%50, %c3, %c0_53] : memref<34x34x128xf32, #tpu.memory_space<vmem>>, vector<16x16x128xf32>
      %52 = vector.extract_strided_slice %41 {offsets = [1, 0], sizes = [1, 128], strides = [1, 1]} : vector<7x128xf32> to vector<1x128xf32>
      %53 = vector.shape_cast %52 : vector<1x128xf32> to vector<1x1x128xf32>
      %54 = vector.broadcast %53 : vector<1x1x128xf32> to vector<16x16x128xf32>
      %55 = arith.mulf %54, %51 : vector<16x16x128xf32>
      %56 = arith.addf %49, %55 : vector<16x16x128xf32>
      %57 = arith.index_cast %42 : i32 to index
      %c6 = arith.constant 6 : index
      %c0_54 = arith.constant 0 : index
      %58 = vector.load %arg10[%57, %c6, %c0_54] : memref<34x34x128xf32, #tpu.memory_space<vmem>>, vector<16x16x128xf32>
      %59 = vector.extract_strided_slice %41 {offsets = [2, 0], sizes = [1, 128], strides = [1, 1]} : vector<7x128xf32> to vector<1x128xf32>
      %60 = vector.shape_cast %59 : vector<1x128xf32> to vector<1x1x128xf32>
      %61 = vector.broadcast %60 : vector<1x1x128xf32> to vector<16x16x128xf32>
      %62 = arith.mulf %61, %58 : vector<16x16x128xf32>
      %63 = arith.addf %56, %62 : vector<16x16x128xf32>
      %64 = arith.index_cast %42 : i32 to index
      %c9_55 = arith.constant 9 : index
      %c0_56 = arith.constant 0 : index
      %65 = vector.load %arg10[%64, %c9_55, %c0_56] : memref<34x34x128xf32, #tpu.memory_space<vmem>>, vector<16x16x128xf32>
      %66 = vector.extract_strided_slice %41 {offsets = [3, 0], sizes = [1, 128], strides = [1, 1]} : vector<7x128xf32> to vector<1x128xf32>
      %67 = vector.shape_cast %66 : vector<1x128xf32> to vector<1x1x128xf32>
      %68 = vector.broadcast %67 : vector<1x1x128xf32> to vector<16x16x128xf32>
      %69 = arith.mulf %68, %65 : vector<16x16x128xf32>
      %70 = arith.addf %63, %69 : vector<16x16x128xf32>
      %71 = arith.index_cast %42 : i32 to index
      %c12 = arith.constant 12 : index
      %c0_57 = arith.constant 0 : index
      %72 = vector.load %arg10[%71, %c12, %c0_57] : memref<34x34x128xf32, #tpu.memory_space<vmem>>, vector<16x16x128xf32>
      %73 = vector.extract_strided_slice %41 {offsets = [4, 0], sizes = [1, 128], strides = [1, 1]} : vector<7x128xf32> to vector<1x128xf32>
      %74 = vector.shape_cast %73 : vector<1x128xf32> to vector<1x1x128xf32>
      %75 = vector.broadcast %74 : vector<1x1x128xf32> to vector<16x16x128xf32>
      %76 = arith.mulf %75, %72 : vector<16x16x128xf32>
      %77 = arith.addf %70, %76 : vector<16x16x128xf32>
      %78 = arith.index_cast %42 : i32 to index
      %c15 = arith.constant 15 : index
      %c0_58 = arith.constant 0 : index
      %79 = vector.load %arg10[%78, %c15, %c0_58] : memref<34x34x128xf32, #tpu.memory_space<vmem>>, vector<16x16x128xf32>
      %80 = vector.extract_strided_slice %41 {offsets = [5, 0], sizes = [1, 128], strides = [1, 1]} : vector<7x128xf32> to vector<1x128xf32>
      %81 = vector.shape_cast %80 : vector<1x128xf32> to vector<1x1x128xf32>
      %82 = vector.broadcast %81 : vector<1x1x128xf32> to vector<16x16x128xf32>
      %83 = arith.mulf %82, %79 : vector<16x16x128xf32>
      %84 = arith.addf %77, %83 : vector<16x16x128xf32>
      %85 = arith.index_cast %42 : i32 to index
      %c18_59 = arith.constant 18 : index
      %c0_60 = arith.constant 0 : index
      %86 = vector.load %arg10[%85, %c18_59, %c0_60] : memref<34x34x128xf32, #tpu.memory_space<vmem>>, vector<16x16x128xf32>
      %87 = vector.extract_strided_slice %41 {offsets = [6, 0], sizes = [1, 128], strides = [1, 1]} : vector<7x128xf32> to vector<1x128xf32>
      %88 = vector.shape_cast %87 : vector<1x128xf32> to vector<1x1x128xf32>
      %89 = vector.broadcast %88 : vector<1x1x128xf32> to vector<16x16x128xf32>
      %90 = arith.mulf %89, %86 : vector<16x16x128xf32>
      %91 = arith.addf %84, %90 : vector<16x16x128xf32>
      scf.yield %91 : vector<16x16x128xf32>
    }
    %c7_i32_39 = arith.constant 7 : i32
    %28 = vector.shape_cast %27 : vector<16x16x128xf32> to vector<256x128xf32>
    %c0_40 = arith.constant 0 : index
    %c0_41 = arith.constant 0 : index
    %29 = vector.load %arg6[%c0_40, %c0_41] : memref<128x128xf32, #tpu.memory_space<vmem>>, vector<128x128xf32>
    %cst_42 = arith.constant dense<0.000000e+00> : vector<256x128xf32>
    %30 = tpu.matmul %28, %29, %cst_42 {dimension_numbers = #tpu.dot_dimension_numbers<[1], [0], [0], [1], [0, 0, 1, 1], [], []>} : vector<256x128xf32>, vector<128x128xf32>, vector<256x128xf32> -> vector<256x128xf32>
    %c0_43 = arith.constant 0 : index
    %c0_44 = arith.constant 0 : index
    %31 = vector.load %arg7[%c0_43, %c0_44] : memref<1x128xf32, #tpu.memory_space<vmem>>, vector<1x128xf32>
    %32 = vector.broadcast %31 : vector<1x128xf32> to vector<256x128xf32>
    %33 = arith.addf %30, %32 : vector<256x128xf32>
    %34 = vector.shape_cast %33 : vector<256x128xf32> to vector<16x16x128xf32>
    %35 = arith.mulf %1, %34 : vector<16x16x128xf32>
    %c0_45 = arith.constant 0 : index
    %c0_46 = arith.constant 0 : index
    %c0_47 = arith.constant 0 : index
    %c0_48 = arith.constant 0 : index
    %36 = vector.load %arg8[%c0_45, %c0_46, %c0_47, %c0_48] : memref<1x16x16x128xf32, #tpu.memory_space<vmem>>, vector<1x16x16x128xf32>
    %37 = vector.shape_cast %36 : vector<1x16x16x128xf32> to vector<16x16x128xf32>
    %38 = vector.shape_cast %35 : vector<16x16x128xf32> to vector<1x16x16x128xf32>
    tpu.vector_store %arg8[%c0_45, %c0_46, %c0_47, %c0_48], %38 {strides = array<i32>} : memref<1x16x16x128xf32, #tpu.memory_space<vmem>>, vector<1x16x16x128xf32>,
    return
  }
  func.func @transform_0(%arg0: i32) -> (i32, i32, i32, i32) {
    %c0_i32 = arith.constant 0 : i32
    %c0_i32_0 = arith.constant 0 : i32
    %c0_i32_1 = arith.constant 0 : i32
    %c0_i32_2 = arith.constant 0 : i32
    return %arg0, %c0_i32, %c0_i32_0, %c0_i32_1 : i32, i32, i32, i32
  }
  func.func @transform_1(%arg0: i32) -> (i32, i32, i32) {
    %c0_i32 = arith.constant 0 : i32
    %c0_i32_0 = arith.constant 0 : i32
    %c0_i32_1 = arith.constant 0 : i32
    %c0_i32_2 = arith.constant 0 : i32
    return %c0_i32, %c0_i32_0, %c0_i32_1 : i32, i32, i32
  }
  func.func @transform_2(%arg0: i32) -> (i32, i32) {
    %c0_i32 = arith.constant 0 : i32
    %c0_i32_0 = arith.constant 0 : i32
    %c0_i32_1 = arith.constant 0 : i32
    return %c0_i32, %c0_i32_0 : i32, i32
  }
  func.func @transform_3(%arg0: i32) -> (i32, i32, i32) {
    %c0_i32 = arith.constant 0 : i32
    %c0_i32_0 = arith.constant 0 : i32
    %c0_i32_1 = arith.constant 0 : i32
    %c0_i32_2 = arith.constant 0 : i32
    return %c0_i32, %c0_i32_0, %c0_i32_1 : i32, i32, i32
  }
  func.func @transform_4(%arg0: i32) -> (i32, i32) {
    %c0_i32 = arith.constant 0 : i32
    %c0_i32_0 = arith.constant 0 : i32
    %c0_i32_1 = arith.constant 0 : i32
    return %c0_i32, %c0_i32_0 : i32, i32
  }
  func.func @transform_5(%arg0: i32) -> (i32, i32) {
    %c0_i32 = arith.constant 0 : i32
    %c0_i32_0 = arith.constant 0 : i32
    %c0_i32_1 = arith.constant 0 : i32
    return %c0_i32, %c0_i32_0 : i32, i32
  }
  func.func @transform_6(%arg0: i32) -> (i32, i32) {
    %c0_i32 = arith.constant 0 : i32
    %c0_i32_0 = arith.constant 0 : i32
    %c0_i32_1 = arith.constant 0 : i32
    return %c0_i32, %c0_i32_0 : i32, i32
  }
  func.func @transform_7(%arg0: i32) -> (i32, i32, i32, i32) {
    %c0_i32 = arith.constant 0 : i32
    %c0_i32_0 = arith.constant 0 : i32
    %c0_i32_1 = arith.constant 0 : i32
    %c0_i32_2 = arith.constant 0 : i32
    return %arg0, %c0_i32, %c0_i32_0, %c0_i32_1 : i32, i32, i32, i32
  }
}

</mosaic_0001>

<llo_original>
// kernel: tpu_custom_call.1
$region0: #{tpu_custom_call.1}
  #allocation0 [shape = 'u32[]', space=smem, size = 0x4, offset = 0x4, fixed_abs, tag = 'smem constant byte address 0x4 - core index']
  #allocation1 [shape = 'u32[144,128]{1,0:T(1,128)}', space=vmem, size = 0x12000, scoped, tag = 'internal scratch']
  #allocation2 [shape = 'f32[20,20,128]{2,1,0:T(8,128)}', space=vmem, size = 0x3c000, scoped, tag = 'scratch operand']
  #allocation3 [shape = 'f32[34,34,128]{2,1,0:T(8,128)}', space=vmem, size = 0xaa000, scoped, tag = 'scratch operand']
  %s0 = inlined_call_operand.hbm [shape: f32[2,16,16,128], index: 0, kind: input, shape index: {}]
  %s1 = inlined_call_operand.hbm [shape: f32[5,5,128], index: 1, kind: input, shape index: {}]
  %s2 = inlined_call_operand.vmem [shape: f32[1,128], index: 2, kind: input, shape index: {}]
  %s3 = inlined_call_operand.hbm [shape: f32[7,7,128], index: 3, kind: input, shape index: {}]
  %s4 = inlined_call_operand.vmem [shape: f32[1,128], index: 4, kind: input, shape index: {}]
  %s5 = inlined_call_operand.hbm [shape: f32[128,128], index: 5, kind: input, shape index: {}]
  %s6 = inlined_call_operand.vmem [shape: f32[1,128], index: 6, kind: input, shape index: {}]
  %s7 = inlined_call_operand.hbm [shape: f32[2,16,16,128], index: 7, kind: output, shape index: {}]
  %s8 = sld [smem:[#allocation0]]
  $region91: #{tpu_custom_call.1} parent=0
    _
  %s10 = ssub.s32 1, %s8
  %s11 = scalar_select 0, %s10, %s8
  $region1: #{tpu_custom_call.1} parent=0
    #allocation4 [shape = 'u8[262144]{0}', space=vmem, size = 0x40000, scoped, tag = 'input window, operand 0']
    #allocation5 [shape = 's32[2]{0}', space=sflag, size = 0x8, scoped, tag = 'scoped memory for tpu_custom_call.1']
    #allocation6 [shape = 's32[2]{0}', space=sflag, size = 0x8, scoped, tag = 'scoped memory for tpu_custom_call.1']
    #allocation7 [shape = 'u8[20480]{0}', space=vmem, size = 0x5000, scoped, tag = 'input window, operand 1, single buffered']
    #allocation8 [shape = 's32[1]{0}', space=sflag, size = 0x4, scoped, tag = 'scoped memory for tpu_custom_call.1']
    #allocation9 [shape = 'u8[28672]{0}', space=vmem, size = 0x7000, scoped, tag = 'input window, operand 3, single buffered']
    #allocation10 [shape = 'u8[65536]{0}', space=vmem, size = 0x10000, scoped, tag = 'input window, operand 5, single buffered']
    #allocation11 [shape = 's32[1]{0}', space=sflag, size = 0x4, scoped, tag = 'scoped memory for tpu_custom_call.1']
    #allocation12 [shape = 'u8[262144]{0}', space=vmem, size = 0x40000, scoped, tag = 'output window, operand 0']
    %12 = vsyncpa [#allocation5], 0
    %s13 = scalar_lea.sflag [#allocation5], 1
    %14 = vsyncpa %s13, 0
    %15 = vsyncpa [#allocation8], 0
    %16 = vsyncpa [#allocation11], 0
    %17 = vsyncpa [#allocation6], 0
    %s18 = scalar_lea.sflag [#allocation6], 1
    %19 = vsyncpa %s18, 0
    loop: start=0, step=1, limit=4
    $region2: #{tpu_custom_call.1} parent=1 // loop_pre_header
      _
    $region3: #{tpu_custom_call.1} parent=1 // loop_header
      %s21 = sphi 0, %s25
      %p22 = scmp.ge.s32.totalorder %s21, 4
      %s31 = sphi 0, %s33
      %s34 = sphi 0, %s31
      %s35 = sphi 0, %s34
      %s51 = sphi 0, %s35
      %s55 = sphi 0, %s55
      %s57 = sphi 0, %s55
      %s58 = sphi 0, %s57
      %s72 = sphi 0, %s58
      %s76 = sphi 0, %s76
      %s78 = sphi 0, %s76
      %s79 = sphi 0, %s78
      %s93 = sphi 0, %s79
      %s97 = sphi 0, %s97
      %s99 = sphi 0, %s97
      %s100 = sphi 0, %s99
      %s114 = sphi 0, %s100
      %s118 = sphi 0, %s118
      %s120 = sphi 0, %s118
      %s121 = sphi 0, %s120
      %s135 = sphi 0, %s121
      %s139 = sphi 0, %s139
      %s141 = sphi 0, %s139
      %s142 = sphi 0, %s141
      %s156 = sphi 0, %s142
      %s160 = sphi 0, %s160
      %s162 = sphi 0, %s160
      %s163 = sphi 0, %s162
      %s177 = sphi 0, %s163
      %s183 = sphi 0, %s185
      %s186 = sphi 0, %s183
      %s187 = sphi 0, %s186
      %s203 = sphi 0, %s187
    $region4: #{tpu_custom_call.1} parent=1 // loop_header_branch
      %24 = sbr.rel (%p22) target = $region8
    $region5: #{tpu_custom_call.1} parent=1 // loop_body
      %s26 = ssub.s32 %s21, 1
      %s27 = ssub.s32 %s21, 2
      %s28 = sadd.s32 %s21, 1
      %s29 = ssub.s32 %s21, %s28
      %p30 = scmp.eq.s32.totalorder %s29, 0
      %s32 = sadd.s32 %s31, 1
      %s33 = scalar_select %p30, %s31, %s32
      %p36 = pneg %p30
      %p37 = scmp.eq.s32.totalorder %s21, 1
      %p38 = por %p36, %p37
      %p39 = scmp.ne.s32.totalorder %s31, %s34
      %p40 = scmp.eq.s32.totalorder %s21, 0
      %p41 = por %p39, %p40
      %p42 = scmp.ne.s32.totalorder %s31, %s34
      %p43 = scmp.eq.s32.totalorder %s26, 1
      %p44 = por %p42, %p43
      %p45 = scmp.ne.s32.totalorder %s34, %s35
      %p46 = scmp.eq.s32.totalorder %s26, 0
      %p47 = por %p45, %p46
      %p48 = scmp.ne.s32.totalorder %s34, %s35
      %p49 = scmp.eq.s32.totalorder %s27, 1
      %p50 = por %p48, %p49
      %p52 = scmp.ne.s32.totalorder %s35, %s51
      %p53 = scmp.eq.s32.totalorder %s27, 0
      %p54 = por %p52, %p53
      %s56 = sadd.s32 %s55, 1
      %p59 = scmp.eq.s32.totalorder %s21, 1
      %p60 = scmp.ne.s32.totalorder %s55, %s57
      %p61 = scmp.eq.s32.totalorder %s21, 0
      %p62 = por %p60, %p61
      %p63 = scmp.ne.s32.totalorder %s55, %s57
      %p64 = scmp.eq.s32.totalorder %s26, 1
      %p65 = por %p63, %p64
      %p66 = scmp.ne.s32.totalorder %s57, %s58
      %p67 = scmp.eq.s32.totalorder %s26, 0
      %p68 = por %p66, %p67
      %p69 = scmp.ne.s32.totalorder %s57, %s58
      %p70 = scmp.eq.s32.totalorder %s27, 1
      %p71 = por %p69, %p70
      %p73 = scmp.ne.s32.totalorder %s58, %s72
      %p74 = scmp.eq.s32.totalorder %s27, 0
      %p75 = por %p73, %p74
      %s77 = sadd.s32 %s76, 1
      %p80 = scmp.eq.s32.totalorder %s21, 1
      %p81 = scmp.ne.s32.totalorder %s76, %s78
      %p82 = scmp.eq.s32.totalorder %s21, 0
      %p83 = por %p81, %p82
      %p84 = scmp.ne.s32.totalorder %s76, %s78
      %p85 = scmp.eq.s32.totalorder %s26, 1
      %p86 = por %p84, %p85
      %p87 = scmp.ne.s32.totalorder %s78, %s79
      %p88 = scmp.eq.s32.totalorder %s26, 0
      %p89 = por %p87, %p88
      %p90 = scmp.ne.s32.totalorder %s78, %s79
      %p91 = scmp.eq.s32.totalorder %s27, 1
      %p92 = por %p90, %p91
      %p94 = scmp.ne.s32.totalorder %s79, %s93
      %p95 = scmp.eq.s32.totalorder %s27, 0
      %p96 = por %p94, %p95
      %s98 = sadd.s32 %s97, 1
      %p101 = scmp.eq.s32.totalorder %s21, 1
      %p102 = scmp.ne.s32.totalorder %s97, %s99
      %p103 = scmp.eq.s32.totalorder %s21, 0
      %p104 = por %p102, %p103
      %p105 = scmp.ne.s32.totalorder %s97, %s99
      %p106 = scmp.eq.s32.totalorder %s26, 1
      %p107 = por %p105, %p106
      %p108 = scmp.ne.s32.totalorder %s99, %s100
      %p109 = scmp.eq.s32.totalorder %s26, 0
      %p110 = por %p108, %p109
      %p111 = scmp.ne.s32.totalorder %s99, %s100
      %p112 = scmp.eq.s32.totalorder %s27, 1
      %p113 = por %p111, %p112
      %p115 = scmp.ne.s32.totalorder %s100, %s114
      %p116 = scmp.eq.s32.totalorder %s27, 0
      %p117 = por %p115, %p116
      %s119 = sadd.s32 %s118, 1
      %p122 = scmp.eq.s32.totalorder %s21, 1
      %p123 = scmp.ne.s32.totalorder %s118, %s120
      %p124 = scmp.eq.s32.totalorder %s21, 0
      %p125 = por %p123, %p124
      %p126 = scmp.ne.s32.totalorder %s118, %s120
      %p127 = scmp.eq.s32.totalorder %s26, 1
      %p128 = por %p126, %p127
      %p129 = scmp.ne.s32.totalorder %s120, %s121
      %p130 = scmp.eq.s32.totalorder %s26, 0
      %p131 = por %p129, %p130
      %p132 = scmp.ne.s32.totalorder %s120, %s121
      %p133 = scmp.eq.s32.totalorder %s27, 1
      %p134 = por %p132, %p133
      %p136 = scmp.ne.s32.totalorder %s121, %s135
      %p137 = scmp.eq.s32.totalorder %s27, 0
      %p138 = por %p136, %p137
      %s140 = sadd.s32 %s139, 1
      %p143 = scmp.eq.s32.totalorder %s21, 1
      %p144 = scmp.ne.s32.totalorder %s139, %s141
      %p145 = scmp.eq.s32.totalorder %s21, 0
      %p146 = por %p144, %p145
      %p147 = scmp.ne.s32.totalorder %s139, %s141
      %p148 = scmp.eq.s32.totalorder %s26, 1
      %p149 = por %p147, %p148
      %p150 = scmp.ne.s32.totalorder %s141, %s142
      %p151 = scmp.eq.s32.totalorder %s26, 0
      %p152 = por %p150, %p151
      %p153 = scmp.ne.s32.totalorder %s141, %s142
      %p154 = scmp.eq.s32.totalorder %s27, 1
      %p155 = por %p153, %p154
      %p157 = scmp.ne.s32.totalorder %s142, %s156
      %p158 = scmp.eq.s32.totalorder %s27, 0
      %p159 = por %p157, %p158
      %s161 = sadd.s32 %s160, 1
      %p164 = scmp.eq.s32.totalorder %s21, 1
      %p165 = scmp.ne.s32.totalorder %s160, %s162
      %p166 = scmp.eq.s32.totalorder %s21, 0
      %p167 = por %p165, %p166
      %p168 = scmp.ne.s32.totalorder %s160, %s162
      %p169 = scmp.eq.s32.totalorder %s26, 1
      %p170 = por %p168, %p169
      %p171 = scmp.ne.s32.totalorder %s162, %s163
      %p172 = scmp.eq.s32.totalorder %s26, 0
      %p173 = por %p171, %p172
      %p174 = scmp.ne.s32.totalorder %s162, %s163
      %p175 = scmp.eq.s32.totalorder %s27, 1
      %p176 = por %p174, %p175
      %p178 = scmp.ne.s32.totalorder %s163, %s177
      %p179 = scmp.eq.s32.totalorder %s27, 0
      %p180 = por %p178, %p179
      %s181 = ssub.s32 %s21, %s28
      %p182 = scmp.eq.s32.totalorder %s181, 0
      %s184 = sadd.s32 %s183, 1
      %s185 = scalar_select %p182, %s183, %s184
      %p188 = pneg %p182
      %p189 = scmp.eq.s32.totalorder %s21, 1
      %p190 = por %p188, %p189
      %p191 = scmp.ne.s32.totalorder %s183, %s186
      %p192 = scmp.eq.s32.totalorder %s21, 0
      %p193 = por %p191, %p192
      %p194 = scmp.ne.s32.totalorder %s183, %s186
      %p195 = scmp.eq.s32.totalorder %s26, 1
      %p196 = por %p194, %p195
      %p197 = scmp.ne.s32.totalorder %s186, %s187
      %p198 = scmp.eq.s32.totalorder %s26, 0
      %p199 = por %p197, %p198
      %p200 = scmp.ne.s32.totalorder %s186, %s187
      %p201 = scmp.eq.s32.totalorder %s27, 1
      %p202 = por %p200, %p201
      %p204 = scmp.ne.s32.totalorder %s187, %s203
      %p205 = scmp.eq.s32.totalorder %s27, 0
      %p206 = por %p204, %p205
      %p207 = scmp.le.s32.totalorder 1, %s21
      %p208 = scmp.lt.s32.totalorder %s21, 3
      %p209 = pnand %p207, %p208
      %p210 = pneg %p209
      // Predicated region
      $region9: #{tpu_custom_call.1} parent=5 // pred_check
        _
      $region10: #{tpu_custom_call.1} parent=5 // pred_check_branch
        %212 = sbr.rel (%p209) target = $region12
      $region11: #{tpu_custom_call.1} parent=5 // pred_region
        %s213 = ssub.s32 %s21, 1
        // Predicated region
        $region13: #{tpu_custom_call.1} parent=11 // pred_check
          %p214 = pneg %p68
        $region14: #{tpu_custom_call.1} parent=11 // pred_check_branch
          %216 = sbr.rel (%p214) target = $region16
        $region15: #{tpu_custom_call.1} parent=11 // pred_region
          %s218 = ssub.s32 640, 640
          %219 = vsyncadd [#allocation8], %s218
          %s220 = sshll.u32 [#allocation7], 4
          %s221 = int_to_ptr.vmem [resolvable:$true] %s220
          %226 = dma.hbm_to_vmem [thread:$0]  %s1, 640, %s221, [#allocation8], 128, 128, 8
        $region16: #{tpu_custom_call.1} parent=11 // pred_fallthru
          _
        // Predicated region
        $region17: #{tpu_custom_call.1} parent=11 // pred_check
          %p227 = pneg %p89
        $region18: #{tpu_custom_call.1} parent=11 // pred_check_branch
          %229 = sbr.rel (%p227) target = $region20
        $region19: #{tpu_custom_call.1} parent=11 // pred_region
          _
        $region20: #{tpu_custom_call.1} parent=11 // pred_fallthru
          _
        // Predicated region
        $region21: #{tpu_custom_call.1} parent=11 // pred_check
          %p230 = pneg %p110
        $region22: #{tpu_custom_call.1} parent=11 // pred_check_branch
          %232 = sbr.rel (%p230) target = $region24
        $region23: #{tpu_custom_call.1} parent=11 // pred_region
          %s234 = ssub.s32 896, 896
          %235 = vsyncadd [#allocation8], %s234
          %s236 = sshll.u32 [#allocation9], 4
          %s237 = int_to_ptr.vmem [resolvable:$true] %s236
          %242 = dma.hbm_to_vmem [thread:$0]  %s3, 896, %s237, [#allocation8], 128, 128, 8
        $region24: #{tpu_custom_call.1} parent=11 // pred_fallthru
          _
        // Predicated region
        $region25: #{tpu_custom_call.1} parent=11 // pred_check
          %p243 = pneg %p131
        $region26: #{tpu_custom_call.1} parent=11 // pred_check_branch
          %245 = sbr.rel (%p243) target = $region28
        $region27: #{tpu_custom_call.1} parent=11 // pred_region
          _
        $region28: #{tpu_custom_call.1} parent=11 // pred_fallthru
          _
        // Predicated region
        $region29: #{tpu_custom_call.1} parent=11 // pred_check
          %p246 = pneg %p152
        $region30: #{tpu_custom_call.1} parent=11 // pred_check_branch
          %248 = sbr.rel (%p246) target = $region32
        $region31: #{tpu_custom_call.1} parent=11 // pred_region
          %s250 = ssub.s32 2048, 2048
          %251 = vsyncadd [#allocation11], %s250
          %s252 = sshll.u32 [#allocation10], 4
          %s253 = int_to_ptr.vmem [resolvable:$true] %s252
          %258 = dma.hbm_to_vmem [thread:$0]  %s5, 2048, %s253, [#allocation11], 128, 128, 8
        $region32: #{tpu_custom_call.1} parent=11 // pred_fallthru
          _
        // Predicated region
        $region33: #{tpu_custom_call.1} parent=11 // pred_check
          %p259 = pneg %p173
        $region34: #{tpu_custom_call.1} parent=11 // pred_check_branch
          %261 = sbr.rel (%p259) target = $region36
        $region35: #{tpu_custom_call.1} parent=11 // pred_region
          _
        $region36: #{tpu_custom_call.1} parent=11 // pred_fallthru
          _
      $region12: #{tpu_custom_call.1} parent=5 // pred_fallthru
        _
      %p262 = scmp.lt.s32.totalorder %s21, 2
      // Predicated region
      $region37: #{tpu_custom_call.1} parent=5 // pred_check
        %p263 = pneg %p262
      $region38: #{tpu_custom_call.1} parent=5 // pred_check_branch
        %265 = sbr.rel (%p263) target = $region40
      $region39: #{tpu_custom_call.1} parent=5 // pred_region
        // Predicated region
        $region41: #{tpu_custom_call.1} parent=39 // pred_check
          %p266 = pneg %p41
        $region42: #{tpu_custom_call.1} parent=39 // pred_check_branch
          %268 = sbr.rel (%p266) target = $region44
        $region43: #{tpu_custom_call.1} parent=39 // pred_region
          %s269 = sand.u32 %s31, 1
          %s270 = scalar_lea.sflag [#allocation5], %s269
          %s271 = sand.u32 %s31, 1
          %s272 = smul.addr %s271, 256
          %s273 = scalar_lea.vmem [#allocation4], %s272
          %s275 = ssub.s32 4096, 4096
          %276 = vsyncadd %s270, %s275
          %s277 = smul.addr %s21, 32
          %s278 = smul.addr %s277, 128
          %s279 = scalar_lea.hbm %s0, %s278
          %s280 = sshll.u32 %s273, 4
          %s281 = int_to_ptr.vmem [resolvable:$true] %s280
          %286 = dma.hbm_to_vmem [thread:$0]  %s279, 4096, %s281, %s270, 128, 128, 8
        $region44: #{tpu_custom_call.1} parent=39 // pred_fallthru
          _
      $region40: #{tpu_custom_call.1} parent=5 // pred_fallthru
        _
      %p287 = scmp.le.s32.totalorder 1, %s21
      %p288 = scmp.lt.s32.totalorder %s21, 3
      %p289 = pnand %p287, %p288
      %p290 = pneg %p289
      // Predicated region
      $region45: #{tpu_custom_call.1} parent=5 // pred_check
        _
      $region46: #{tpu_custom_call.1} parent=5 // pred_check_branch
        %292 = sbr.rel (%p289) target = $region48
      $region47: #{tpu_custom_call.1} parent=5 // pred_region
        %s293 = ssub.s32 %s21, 1
        %s294 = sand.u32 %s34, 1
        %s295 = scalar_lea.sflag [#allocation5], %s294
        %s296 = sand.u32 %s34, 1
        %s297 = smul.addr %s296, 256
        %s298 = scalar_lea.vmem [#allocation4], %s297
        // Predicated region
        $region49: #{tpu_custom_call.1} parent=47 // pred_check
          %p299 = pneg %p47
        $region50: #{tpu_custom_call.1} parent=47 // pred_check_branch
          %301 = sbr.rel (%p299) target = $region52
        $region51: #{tpu_custom_call.1} parent=47 // pred_region
          %302 = dma.done %s295, 4096
        $region52: #{tpu_custom_call.1} parent=47 // pred_fallthru
          _
        // Predicated region
        $region53: #{tpu_custom_call.1} parent=47 // pred_check
          %p303 = pneg %p68
        $region54: #{tpu_custom_call.1} parent=47 // pred_check_branch
          %305 = sbr.rel (%p303) target = $region56
        $region55: #{tpu_custom_call.1} parent=47 // pred_region
          %306 = dma.done [#allocation8], 640
        $region56: #{tpu_custom_call.1} parent=47 // pred_fallthru
          _
        // Predicated region
        $region57: #{tpu_custom_call.1} parent=47 // pred_check
          %p307 = pneg %p110
        $region58: #{tpu_custom_call.1} parent=47 // pred_check_branch
          %309 = sbr.rel (%p307) target = $region60
        $region59: #{tpu_custom_call.1} parent=47 // pred_region
          %310 = dma.done [#allocation8], 896
        $region60: #{tpu_custom_call.1} parent=47 // pred_fallthru
          _
        // Predicated region
        $region61: #{tpu_custom_call.1} parent=47 // pred_check
          %p311 = pneg %p152
        $region62: #{tpu_custom_call.1} parent=47 // pred_check_branch
          %313 = sbr.rel (%p311) target = $region64
        $region63: #{tpu_custom_call.1} parent=47 // pred_region
          %314 = dma.done [#allocation11], 2048
        $region64: #{tpu_custom_call.1} parent=47 // pred_fallthru
          _
        %s315 = sand.u32 %s34, 1
        %s316 = scalar_lea.sflag [#allocation5], %s315
        %s317 = sand.u32 %s34, 1
        %s318 = smul.addr %s317, 256
        %s319 = scalar_lea.vmem [#allocation4], %s318
        %p320 = pneg %p47
        %p321 = pneg %p44
        %p322 = pneg %p68
        %p323 = pneg %p65
        %p324 = pneg %p89
        %p325 = pneg %p86
        %p326 = pneg %p110
        %p327 = pneg %p107
        %p328 = pneg %p131
        %p329 = pneg %p128
        %p330 = pneg %p152
        %p331 = pneg %p149
        %p332 = pneg %p173
        %p333 = pneg %p170
        %p334 = pneg %p199
        %p335 = pneg %p196
        %s336 = sand.u32 %s186, 1
        %s337 = scalar_lea.sflag [#allocation6], %s336
        %s338 = sand.u32 %s186, 1
        %s339 = smul.addr %s338, 256
        %s340 = scalar_lea.vmem [#allocation12], %s339
        %v341 = vld [vmem:[%s298] sm:$0xff]
        %v342 = vld [vmem:[%s298 + $0x8] sm:$0xff]
        %v343 = vld [vmem:[%s298 + $0x10] sm:$0xff]
        %v344 = vld [vmem:[%s298 + $0x18] sm:$0xff]
        %v345 = vld [vmem:[%s298 + $0x20] sm:$0xff]
        %v346 = vld [vmem:[%s298 + $0x28] sm:$0xff]
        %v347 = vld [vmem:[%s298 + $0x30] sm:$0xff]
        %v348 = vld [vmem:[%s298 + $0x38] sm:$0xff]
        %v349 = vld [vmem:[%s298 + $0x40] sm:$0xff]
        %v350 = vld [vmem:[%s298 + $0x48] sm:$0xff]
        %v351 = vld [vmem:[%s298 + $0x50] sm:$0xff]
        %v352 = vld [vmem:[%s298 + $0x58] sm:$0xff]
        %v353 = vld [vmem:[%s298 + $0x60] sm:$0xff]
        %v354 = vld [vmem:[%s298 + $0x68] sm:$0xff]
        %v355 = vld [vmem:[%s298 + $0x70] sm:$0xff]
        %v356 = vld [vmem:[%s298 + $0x78] sm:$0xff]
        %v357 = vld [vmem:[%s298 + $0x80] sm:$0xff]
        %v358 = vld [vmem:[%s298 + $0x88] sm:$0xff]
        %v359 = vld [vmem:[%s298 + $0x90] sm:$0xff]
        %v360 = vld [vmem:[%s298 + $0x98] sm:$0xff]
        %v361 = vld [vmem:[%s298 + $0xa0] sm:$0xff]
        %v362 = vld [vmem:[%s298 + $0xa8] sm:$0xff]
        %v363 = vld [vmem:[%s298 + $0xb0] sm:$0xff]
        %v364 = vld [vmem:[%s298 + $0xb8] sm:$0xff]
        %v365 = vld [vmem:[%s298 + $0xc0] sm:$0xff]
        %v366 = vld [vmem:[%s298 + $0xc8] sm:$0xff]
        %v367 = vld [vmem:[%s298 + $0xd0] sm:$0xff]
        %v368 = vld [vmem:[%s298 + $0xd8] sm:$0xff]
        %v369 = vld [vmem:[%s298 + $0xe0] sm:$0xff]
        %v370 = vld [vmem:[%s298 + $0xe8] sm:$0xff]
        %v371 = vld [vmem:[%s298 + $0xf0] sm:$0xff]
        %v372 = vld [vmem:[%s298 + $0xf8] sm:$0xff]
        %373 = vst [vmem:[#allocation2] sm:$0xff] 0.0
        %374 = vst [vmem:[#allocation2 + $0x8] sm:$0xff] 0.0
        %375 = vst [vmem:[#allocation2 + $0x10] sm:$0xf] 0.0
        %376 = vst [vmem:[#allocation2 + $0x18] sm:$0xff] 0.0
        %377 = vst [vmem:[#allocation2 + $0x20] sm:$0xff] 0.0
        %378 = vst [vmem:[#allocation2 + $0x28] sm:$0xf] 0.0
        %s379 = scalar_lea.vmem [#allocation2], 432
        %380 = vst [vmem:[%s379] sm:$0xff] 0.0
        %381 = vst [vmem:[%s379 + $0x8] sm:$0xff] 0.0
        %382 = vst [vmem:[%s379 + $0x10] sm:$0xf] 0.0
        %383 = vst [vmem:[%s379 + $0x18] sm:$0xff] 0.0
        %384 = vst [vmem:[%s379 + $0x20] sm:$0xff] 0.0
        %385 = vst [vmem:[%s379 + $0x28] sm:$0xf] 0.0
        %s386 = scalar_lea.vmem [#allocation2], 48
        %387 = vst [vmem:[%s386] sm:$0x3] 0.0
        %388 = vst [vmem:[%s386 + $0x18] sm:$0x3] 0.0
        %389 = vst [vmem:[%s386 + $0x30] sm:$0x3] 0.0
        %390 = vst [vmem:[%s386 + $0x48] sm:$0x3] 0.0
        %391 = vst [vmem:[%s386 + $0x60] sm:$0x3] 0.0
        %392 = vst [vmem:[%s386 + $0x78] sm:$0x3] 0.0
        %393 = vst [vmem:[%s386 + $0x90] sm:$0x3] 0.0
        %394 = vst [vmem:[%s386 + $0xa8] sm:$0x3] 0.0
        %395 = vst [vmem:[%s386 + $0xc0] sm:$0x3] 0.0
        %396 = vst [vmem:[%s386 + $0xd8] sm:$0x3] 0.0
        %397 = vst [vmem:[%s386 + $0xf0] sm:$0x3] 0.0
        %398 = vst [vmem:[%s386 + $0x108] sm:$0x3] 0.0
        %399 = vst [vmem:[%s386 + $0x120] sm:$0x3] 0.0
        %400 = vst [vmem:[%s386 + $0x138] sm:$0x3] 0.0
        %401 = vst [vmem:[%s386 + $0x150] sm:$0x3] 0.0
        %402 = vst [vmem:[%s386 + $0x168] sm:$0x3] 0.0
        %403 = vst [vmem:[%s386 + $0x12] sm:$0x3] 0.0
        %404 = vst [vmem:[%s386 + $0x2a] sm:$0x3] 0.0
        %405 = vst [vmem:[%s386 + $0x42] sm:$0x3] 0.0
        %406 = vst [vmem:[%s386 + $0x5a] sm:$0x3] 0.0
        %407 = vst [vmem:[%s386 + $0x72] sm:$0x3] 0.0
        %408 = vst [vmem:[%s386 + $0x8a] sm:$0x3] 0.0
        %409 = vst [vmem:[%s386 + $0xa2] sm:$0x3] 0.0
        %410 = vst [vmem:[%s386 + $0xba] sm:$0x3] 0.0
        %411 = vst [vmem:[%s386 + $0xd2] sm:$0x3] 0.0
        %412 = vst [vmem:[%s386 + $0xea] sm:$0x3] 0.0
        %413 = vst [vmem:[%s386 + $0x102] sm:$0x3] 0.0
        %414 = vst [vmem:[%s386 + $0x11a] sm:$0x3] 0.0
        %415 = vst [vmem:[%s386 + $0x132] sm:$0x3] 0.0
        %416 = vst [vmem:[%s386 + $0x14a] sm:$0x3] 0.0
        %417 = vst [vmem:[%s386 + $0x162] sm:$0x3] 0.0
        %418 = vst [vmem:[%s386 + $0x17a] sm:$0x3] 0.0
        %419 = vst [vmem:[%s386 + $0x2] sm:$0xff] %v341
        %420 = vst [vmem:[%s386 + $0xa] sm:$0xff] %v342
        %421 = vst [vmem:[%s386 + $0x1a] sm:$0xff] %v343
        %422 = vst [vmem:[%s386 + $0x22] sm:$0xff] %v344
        %423 = vst [vmem:[%s386 + $0x32] sm:$0xff] %v345
        %424 = vst [vmem:[%s386 + $0x3a] sm:$0xff] %v346
        %425 = vst [vmem:[%s386 + $0x4a] sm:$0xff] %v347
        %426 = vst [vmem:[%s386 + $0x52] sm:$0xff] %v348
        %427 = vst [vmem:[%s386 + $0x62] sm:$0xff] %v349
        %428 = vst [vmem:[%s386 + $0x6a] sm:$0xff] %v350
        %429 = vst [vmem:[%s386 + $0x7a] sm:$0xff] %v351
        %430 = vst [vmem:[%s386 + $0x82] sm:$0xff] %v352
        %431 = vst [vmem:[%s386 + $0x92] sm:$0xff] %v353
        %432 = vst [vmem:[%s386 + $0x9a] sm:$0xff] %v354
        %433 = vst [vmem:[%s386 + $0xaa] sm:$0xff] %v355
        %434 = vst [vmem:[%s386 + $0xb2] sm:$0xff] %v356
        %435 = vst [vmem:[%s386 + $0xc2] sm:$0xff] %v357
        %436 = vst [vmem:[%s386 + $0xca] sm:$0xff] %v358
        %437 = vst [vmem:[%s386 + $0xda] sm:$0xff] %v359
        %438 = vst [vmem:[%s386 + $0xe2] sm:$0xff] %v360
        %439 = vst [vmem:[%s386 + $0xf2] sm:$0xff] %v361
        %440 = vst [vmem:[%s386 + $0xfa] sm:$0xff] %v362
        %441 = vst [vmem:[%s386 + $0x10a] sm:$0xff] %v363
        %442 = vst [vmem:[%s386 + $0x112] sm:$0xff] %v364
        %443 = vst [vmem:[%s386 + $0x122] sm:$0xff] %v365
        %444 = vst [vmem:[%s386 + $0x12a] sm:$0xff] %v366
        %445 = vst [vmem:[%s386 + $0x13a] sm:$0xff] %v367
        %446 = vst [vmem:[%s386 + $0x142] sm:$0xff] %v368
        %447 = vst [vmem:[%s386 + $0x152] sm:$0xff] %v369
        %448 = vst [vmem:[%s386 + $0x15a] sm:$0xff] %v370
        %449 = vst [vmem:[%s386 + $0x16a] sm:$0xff] %v371
        %450 = vst [vmem:[%s386 + $0x172] sm:$0xff] %v372
        %v451 = vld [vmem:[%s2] sm:$0x1]
        %v453 = vlaneseq
        %v454 = vshrl.u32 %v453, 7
        %v455 = vsub.s32 0, %v454
        %v456 = vrot.slane %v451, %v455
        loop: start=0, step=1, limit=5
        $region65: #{tpu_custom_call.1} parent=47 // loop_pre_header
          _
        $region66: #{tpu_custom_call.1} parent=47 // loop_header
          %s459 = sphi 0, %s463
          %p460 = scmp.ge.s32.totalorder %s459, 5
          %v464 = vphi %v456, %v969
          %v465 = vphi %v456, %v970
          %v466 = vphi %v456, %v971
          %v467 = vphi %v456, %v972
          %v468 = vphi %v456, %v973
          %v469 = vphi %v456, %v974
          %v470 = vphi %v456, %v975
          %v471 = vphi %v456, %v976
          %v472 = vphi %v456, %v977
          %v473 = vphi %v456, %v978
          %v474 = vphi %v456, %v979
          %v475 = vphi %v456, %v980
          %v476 = vphi %v456, %v981
          %v477 = vphi %v456, %v982
          %v478 = vphi %v456, %v983
          %v479 = vphi %v456, %v984
          %v480 = vphi %v456, %v985
          %v481 = vphi %v456, %v986
          %v482 = vphi %v456, %v987
          %v483 = vphi %v456, %v988
          %v484 = vphi %v456, %v989
          %v485 = vphi %v456, %v990
          %v486 = vphi %v456, %v991
          %v487 = vphi %v456, %v992
          %v488 = vphi %v456, %v993
          %v489 = vphi %v456, %v994
          %v490 = vphi %v456, %v995
          %v491 = vphi %v456, %v996
          %v492 = vphi %v456, %v997
          %v493 = vphi %v456, %v998
          %v494 = vphi %v456, %v999
          %v495 = vphi %v456, %v1000
        $region67: #{tpu_custom_call.1} parent=47 // loop_header_branch
          %462 = sbr.rel (%p460) target = $region71
        $region68: #{tpu_custom_call.1} parent=47 // loop_body
          %s496 = smul.u32 %s459, 8
          %s497 = scalar_lea.vmem [#allocation7], %s496
          %v498 = vld [vmem:[%s497] sm:$0x1f]
          %s499 = smul.u32 %s459, 24
          %s500 = scalar_lea.vmem [#allocation2], %s499
          %v501 = vld [vmem:[%s500] sm:$0xff]
          %v502 = vld [vmem:[%s500 + $0x8] sm:$0xff]
          %v503 = vld [vmem:[%s500 + $0x18] sm:$0xff]
          %v504 = vld [vmem:[%s500 + $0x20] sm:$0xff]
          %v505 = vld [vmem:[%s500 + $0x30] sm:$0xff]
          %v506 = vld [vmem:[%s500 + $0x38] sm:$0xff]
          %v507 = vld [vmem:[%s500 + $0x48] sm:$0xff]
          %v508 = vld [vmem:[%s500 + $0x50] sm:$0xff]
          %v509 = vld [vmem:[%s500 + $0x60] sm:$0xff]
          %v510 = vld [vmem:[%s500 + $0x68] sm:$0xff]
          %v511 = vld [vmem:[%s500 + $0x78] sm:$0xff]
          %v512 = vld [vmem:[%s500 + $0x80] sm:$0xff]
          %v513 = vld [vmem:[%s500 + $0x90] sm:$0xff]
          %v514 = vld [vmem:[%s500 + $0x98] sm:$0xff]
          %v515 = vld [vmem:[%s500 + $0xa8] sm:$0xff]
          %v516 = vld [vmem:[%s500 + $0xb0] sm:$0xff]
          %v517 = vld [vmem:[%s500 + $0xc0] sm:$0xff]
          %v518 = vld [vmem:[%s500 + $0xc8] sm:$0xff]
          %v519 = vld [vmem:[%s500 + $0xd8] sm:$0xff]
          %v520 = vld [vmem:[%s500 + $0xe0] sm:$0xff]
          %v521 = vld [vmem:[%s500 + $0xf0] sm:$0xff]
          %v522 = vld [vmem:[%s500 + $0xf8] sm:$0xff]
          %v523 = vld [vmem:[%s500 + $0x108] sm:$0xff]
          %v524 = vld [vmem:[%s500 + $0x110] sm:$0xff]
          %v525 = vld [vmem:[%s500 + $0x120] sm:$0xff]
          %v526 = vld [vmem:[%s500 + $0x128] sm:$0xff]
          %v527 = vld [vmem:[%s500 + $0x138] sm:$0xff]
          %v528 = vld [vmem:[%s500 + $0x140] sm:$0xff]
          %v529 = vld [vmem:[%s500 + $0x150] sm:$0xff]
          %v530 = vld [vmem:[%s500 + $0x158] sm:$0xff]
          %v531 = vld [vmem:[%s500 + $0x168] sm:$0xff]
          %v532 = vld [vmem:[%s500 + $0x170] sm:$0xff]
          %v533 = vlaneseq
          %v534 = vshrl.u32 %v533, 7
          %v535 = vsub.s32 0, %v534
          %v536 = vrot.slane %v498, %v535
          %v537 = vmul.f32 %v536, %v501
          %v538 = vmul.f32 %v536, %v502
          %v539 = vmul.f32 %v536, %v503
          %v540 = vmul.f32 %v536, %v504
          %v541 = vmul.f32 %v536, %v505
          %v542 = vmul.f32 %v536, %v506
          %v543 = vmul.f32 %v536, %v507
          %v544 = vmul.f32 %v536, %v508
          %v545 = vmul.f32 %v536, %v509
          %v546 = vmul.f32 %v536, %v510
          %v547 = vmul.f32 %v536, %v511
          %v548 = vmul.f32 %v536, %v512
          %v549 = vmul.f32 %v536, %v513
          %v550 = vmul.f32 %v536, %v514
          %v551 = vmul.f32 %v536, %v515
          %v552 = vmul.f32 %v536, %v516
          %v553 = vmul.f32 %v536, %v517
          %v554 = vmul.f32 %v536, %v518
          %v555 = vmul.f32 %v536, %v519
          %v556 = vmul.f32 %v536, %v520
          %v557 = vmul.f32 %v536, %v521
          %v558 = vmul.f32 %v536, %v522
          %v559 = vmul.f32 %v536, %v523
          %v560 = vmul.f32 %v536, %v524
          %v561 = vmul.f32 %v536, %v525
          %v562 = vmul.f32 %v536, %v526
          %v563 = vmul.f32 %v536, %v527
          %v564 = vmul.f32 %v536, %v528
          %v565 = vmul.f32 %v536, %v529
          %v566 = vmul.f32 %v536, %v530
          %v567 = vmul.f32 %v536, %v531
          %v568 = vmul.f32 %v536, %v532
          %v569 = vadd.f32 %v464, %v537
          %v570 = vadd.f32 %v465, %v538
          %v571 = vadd.f32 %v466, %v539
          %v572 = vadd.f32 %v467, %v540
          %v573 = vadd.f32 %v468, %v541
          %v574 = vadd.f32 %v469, %v542
          %v575 = vadd.f32 %v470, %v543
          %v576 = vadd.f32 %v471, %v544
          %v577 = vadd.f32 %v472, %v545
          %v578 = vadd.f32 %v473, %v546
          %v579 = vadd.f32 %v474, %v547
          %v580 = vadd.f32 %v475, %v548
          %v581 = vadd.f32 %v476, %v549
          %v582 = vadd.f32 %v477, %v550
          %v583 = vadd.f32 %v478, %v551
          %v584 = vadd.f32 %v479, %v552
          %v585 = vadd.f32 %v480, %v553
          %v586 = vadd.f32 %v481, %v554
          %v587 = vadd.f32 %v482, %v555
          %v588 = vadd.f32 %v483, %v556
          %v589 = vadd.f32 %v484, %v557
          %v590 = vadd.f32 %v485, %v558
          %v591 = vadd.f32 %v486, %v559
          %v592 = vadd.f32 %v487, %v560
          %v593 = vadd.f32 %v488, %v561
          %v594 = vadd.f32 %v489, %v562
          %v595 = vadd.f32 %v490, %v563
          %v596 = vadd.f32 %v491, %v564
          %v597 = vadd.f32 %v492, %v565
          %v598 = vadd.f32 %v493, %v566
          %v599 = vadd.f32 %v494, %v567
          %v600 = vadd.f32 %v495, %v568
          %v601 = vld [vmem:[%s500 + $0x1] sm:$0xff]
          %v602 = vld [vmem:[%s500 + $0x9] sm:$0xff]
          %v603 = vld [vmem:[%s500 + $0x19] sm:$0xff]
          %v604 = vld [vmem:[%s500 + $0x21] sm:$0xff]
          %v605 = vld [vmem:[%s500 + $0x31] sm:$0xff]
          %v606 = vld [vmem:[%s500 + $0x39] sm:$0xff]
          %v607 = vld [vmem:[%s500 + $0x49] sm:$0xff]
          %v608 = vld [vmem:[%s500 + $0x51] sm:$0xff]
          %v609 = vld [vmem:[%s500 + $0x61] sm:$0xff]
          %v610 = vld [vmem:[%s500 + $0x69] sm:$0xff]
          %v611 = vld [vmem:[%s500 + $0x79] sm:$0xff]
          %v612 = vld [vmem:[%s500 + $0x81] sm:$0xff]
          %v613 = vld [vmem:[%s500 + $0x91] sm:$0xff]
          %v614 = vld [vmem:[%s500 + $0x99] sm:$0xff]
          %v615 = vld [vmem:[%s500 + $0xa9] sm:$0xff]
          %v616 = vld [vmem:[%s500 + $0xb1] sm:$0xff]
          %v617 = vld [vmem:[%s500 + $0xc1] sm:$0xff]
          %v618 = vld [vmem:[%s500 + $0xc9] sm:$0xff]
          %v619 = vld [vmem:[%s500 + $0xd9] sm:$0xff]
          %v620 = vld [vmem:[%s500 + $0xe1] sm:$0xff]
          %v621 = vld [vmem:[%s500 + $0xf1] sm:$0xff]
          %v622 = vld [vmem:[%s500 + $0xf9] sm:$0xff]
          %v623 = vld [vmem:[%s500 + $0x109] sm:$0xff]
          %v624 = vld [vmem:[%s500 + $0x111] sm:$0xff]
          %v625 = vld [vmem:[%s500 + $0x121] sm:$0xff]
          %v626 = vld [vmem:[%s500 + $0x129] sm:$0xff]
          %v627 = vld [vmem:[%s500 + $0x139] sm:$0xff]
          %v628 = vld [vmem:[%s500 + $0x141] sm:$0xff]
          %v629 = vld [vmem:[%s500 + $0x151] sm:$0xff]
          %v630 = vld [vmem:[%s500 + $0x159] sm:$0xff]
          %v631 = vld [vmem:[%s500 + $0x169] sm:$0xff]
          %v632 = vld [vmem:[%s500 + $0x171] sm:$0xff]
          %v633 = vlaneseq
          %v634 = vshrl.u32 %v633, 7
          %v635 = vsub.s32 1, %v634
          %v636 = vrot.slane %v498, %v635
          %v637 = vmul.f32 %v636, %v601
          %v638 = vmul.f32 %v636, %v602
          %v639 = vmul.f32 %v636, %v603
          %v640 = vmul.f32 %v636, %v604
          %v641 = vmul.f32 %v636, %v605
          %v642 = vmul.f32 %v636, %v606
          %v643 = vmul.f32 %v636, %v607
          %v644 = vmul.f32 %v636, %v608
          %v645 = vmul.f32 %v636, %v609
          %v646 = vmul.f32 %v636, %v610
          %v647 = vmul.f32 %v636, %v611
          %v648 = vmul.f32 %v636, %v612
          %v649 = vmul.f32 %v636, %v613
          %v650 = vmul.f32 %v636, %v614
          %v651 = vmul.f32 %v636, %v615
          %v652 = vmul.f32 %v636, %v616
          %v653 = vmul.f32 %v636, %v617
          %v654 = vmul.f32 %v636, %v618
          %v655 = vmul.f32 %v636, %v619
          %v656 = vmul.f32 %v636, %v620
          %v657 = vmul.f32 %v636, %v621
          %v658 = vmul.f32 %v636, %v622
          %v659 = vmul.f32 %v636, %v623
          %v660 = vmul.f32 %v636, %v624
          %v661 = vmul.f32 %v636, %v625
          %v662 = vmul.f32 %v636, %v626
          %v663 = vmul.f32 %v636, %v627
          %v664 = vmul.f32 %v636, %v628
          %v665 = vmul.f32 %v636, %v629
          %v666 = vmul.f32 %v636, %v630
          %v667 = vmul.f32 %v636, %v631
          %v668 = vmul.f32 %v636, %v632
          %v669 = vadd.f32 %v569, %v637
          %v670 = vadd.f32 %v570, %v638
          %v671 = vadd.f32 %v571, %v639
          %v672 = vadd.f32 %v572, %v640
          %v673 = vadd.f32 %v573, %v641
          %v674 = vadd.f32 %v574, %v642
          %v675 = vadd.f32 %v575, %v643
          %v676 = vadd.f32 %v576, %v644
          %v677 = vadd.f32 %v577, %v645
          %v678 = vadd.f32 %v578, %v646
          %v679 = vadd.f32 %v579, %v647
          %v680 = vadd.f32 %v580, %v648
          %v681 = vadd.f32 %v581, %v649
          %v682 = vadd.f32 %v582, %v650
          %v683 = vadd.f32 %v583, %v651
          %v684 = vadd.f32 %v584, %v652
          %v685 = vadd.f32 %v585, %v653
          %v686 = vadd.f32 %v586, %v654
          %v687 = vadd.f32 %v587, %v655
          %v688 = vadd.f32 %v588, %v656
          %v689 = vadd.f32 %v589, %v657
          %v690 = vadd.f32 %v590, %v658
          %v691 = vadd.f32 %v591, %v659
          %v692 = vadd.f32 %v592, %v660
          %v693 = vadd.f32 %v593, %v661
          %v694 = vadd.f32 %v594, %v662
          %v695 = vadd.f32 %v595, %v663
          %v696 = vadd.f32 %v596, %v664
          %v697 = vadd.f32 %v597, %v665
          %v698 = vadd.f32 %v598, %v666
          %v699 = vadd.f32 %v599, %v667
          %v700 = vadd.f32 %v600, %v668
          %v701 = vld [vmem:[%s500 + $0x2] sm:$0xff]
          %v702 = vld [vmem:[%s500 + $0xa] sm:$0xff]
          %v703 = vld [vmem:[%s500 + $0x1a] sm:$0xff]
          %v704 = vld [vmem:[%s500 + $0x22] sm:$0xff]
          %v705 = vld [vmem:[%s500 + $0x32] sm:$0xff]
          %v706 = vld [vmem:[%s500 + $0x3a] sm:$0xff]
          %v707 = vld [vmem:[%s500 + $0x4a] sm:$0xff]
          %v708 = vld [vmem:[%s500 + $0x52] sm:$0xff]
          %v709 = vld [vmem:[%s500 + $0x62] sm:$0xff]
          %v710 = vld [vmem:[%s500 + $0x6a] sm:$0xff]
          %v711 = vld [vmem:[%s500 + $0x7a] sm:$0xff]
          %v712 = vld [vmem:[%s500 + $0x82] sm:$0xff]
          %v713 = vld [vmem:[%s500 + $0x92] sm:$0xff]
          %v714 = vld [vmem:[%s500 + $0x9a] sm:$0xff]
          %v715 = vld [vmem:[%s500 + $0xaa] sm:$0xff]
          %v716 = vld [vmem:[%s500 + $0xb2] sm:$0xff]
          %v717 = vld [vmem:[%s500 + $0xc2] sm:$0xff]
          %v718 = vld [vmem:[%s500 + $0xca] sm:$0xff]
          %v719 = vld [vmem:[%s500 + $0xda] sm:$0xff]
          %v720 = vld [vmem:[%s500 + $0xe2] sm:$0xff]
          %v721 = vld [vmem:[%s500 + $0xf2] sm:$0xff]
          %v722 = vld [vmem:[%s500 + $0xfa] sm:$0xff]
          %v723 = vld [vmem:[%s500 + $0x10a] sm:$0xff]
          %v724 = vld [vmem:[%s500 + $0x112] sm:$0xff]
          %v725 = vld [vmem:[%s500 + $0x122] sm:$0xff]
          %v726 = vld [vmem:[%s500 + $0x12a] sm:$0xff]
          %v727 = vld [vmem:[%s500 + $0x13a] sm:$0xff]
          %v728 = vld [vmem:[%s500 + $0x142] sm:$0xff]
          %v729 = vld [vmem:[%s500 + $0x152] sm:$0xff]
          %v730 = vld [vmem:[%s500 + $0x15a] sm:$0xff]
          %v731 = vld [vmem:[%s500 + $0x16a] sm:$0xff]
          %v732 = vld [vmem:[%s500 + $0x172] sm:$0xff]
          %v733 = vlaneseq
          %v734 = vshrl.u32 %v733, 7
          %v735 = vsub.s32 2, %v734
          %v736 = vrot.slane %v498, %v735
          %v737 = vmul.f32 %v736, %v701
          %v738 = vmul.f32 %v736, %v702
          %v739 = vmul.f32 %v736, %v703
          %v740 = vmul.f32 %v736, %v704
          %v741 = vmul.f32 %v736, %v705
          %v742 = vmul.f32 %v736, %v706
          %v743 = vmul.f32 %v736, %v707
          %v744 = vmul.f32 %v736, %v708
          %v745 = vmul.f32 %v736, %v709
          %v746 = vmul.f32 %v736, %v710
          %v747 = vmul.f32 %v736, %v711
          %v748 = vmul.f32 %v736, %v712
          %v749 = vmul.f32 %v736, %v713
          %v750 = vmul.f32 %v736, %v714
          %v751 = vmul.f32 %v736, %v715
          %v752 = vmul.f32 %v736, %v716
          %v753 = vmul.f32 %v736, %v717
          %v754 = vmul.f32 %v736, %v718
          %v755 = vmul.f32 %v736, %v719
          %v756 = vmul.f32 %v736, %v720
          %v757 = vmul.f32 %v736, %v721
          %v758 = vmul.f32 %v736, %v722
          %v759 = vmul.f32 %v736, %v723
          %v760 = vmul.f32 %v736, %v724
          %v761 = vmul.f32 %v736, %v725
          %v762 = vmul.f32 %v736, %v726
          %v763 = vmul.f32 %v736, %v727
          %v764 = vmul.f32 %v736, %v728
          %v765 = vmul.f32 %v736, %v729
          %v766 = vmul.f32 %v736, %v730
          %v767 = vmul.f32 %v736, %v731
          %v768 = vmul.f32 %v736, %v732
          %v769 = vadd.f32 %v669, %v737
          %v770 = vadd.f32 %v670, %v738
          %v771 = vadd.f32 %v671, %v739
          %v772 = vadd.f32 %v672, %v740
          %v773 = vadd.f32 %v673, %v741
          %v774 = vadd.f32 %v674, %v742
          %v775 = vadd.f32 %v675, %v743
          %v776 = vadd.f32 %v676, %v744
          %v777 = vadd.f32 %v677, %v745
          %v778 = vadd.f32 %v678, %v746
          %v779 = vadd.f32 %v679, %v747
          %v780 = vadd.f32 %v680, %v748
          %v781 = vadd.f32 %v681, %v749
          %v782 = vadd.f32 %v682, %v750
          %v783 = vadd.f32 %v683, %v751
          %v784 = vadd.f32 %v684, %v752
          %v785 = vadd.f32 %v685, %v753
          %v786 = vadd.f32 %v686, %v754
          %v787 = vadd.f32 %v687, %v755
          %v788 = vadd.f32 %v688, %v756
          %v789 = vadd.f32 %v689, %v757
          %v790 = vadd.f32 %v690, %v758
          %v791 = vadd.f32 %v691, %v759
          %v792 = vadd.f32 %v692, %v760
          %v793 = vadd.f32 %v693, %v761
          %v794 = vadd.f32 %v694, %v762
          %v795 = vadd.f32 %v695, %v763
          %v796 = vadd.f32 %v696, %v764
          %v797 = vadd.f32 %v697, %v765
          %v798 = vadd.f32 %v698, %v766
          %v799 = vadd.f32 %v699, %v767
          %v800 = vadd.f32 %v700, %v768
          %v801 = vld [vmem:[%s500 + $0x3] sm:$0xff]
          %v802 = vld [vmem:[%s500 + $0xb] sm:$0xff]
          %v803 = vld [vmem:[%s500 + $0x1b] sm:$0xff]
          %v804 = vld [vmem:[%s500 + $0x23] sm:$0xff]
          %v805 = vld [vmem:[%s500 + $0x33] sm:$0xff]
          %v806 = vld [vmem:[%s500 + $0x3b] sm:$0xff]
          %v807 = vld [vmem:[%s500 + $0x4b] sm:$0xff]
          %v808 = vld [vmem:[%s500 + $0x53] sm:$0xff]
          %v809 = vld [vmem:[%s500 + $0x63] sm:$0xff]
          %v810 = vld [vmem:[%s500 + $0x6b] sm:$0xff]
          %v811 = vld [vmem:[%s500 + $0x7b] sm:$0xff]
          %v812 = vld [vmem:[%s500 + $0x83] sm:$0xff]
          %v813 = vld [vmem:[%s500 + $0x93] sm:$0xff]
          %v814 = vld [vmem:[%s500 + $0x9b] sm:$0xff]
          %v815 = vld [vmem:[%s500 + $0xab] sm:$0xff]
          %v816 = vld [vmem:[%s500 + $0xb3] sm:$0xff]
          %v817 = vld [vmem:[%s500 + $0xc3] sm:$0xff]
          %v818 = vld [vmem:[%s500 + $0xcb] sm:$0xff]
          %v819 = vld [vmem:[%s500 + $0xdb] sm:$0xff]
          %v820 = vld [vmem:[%s500 + $0xe3] sm:$0xff]
          %v821 = vld [vmem:[%s500 + $0xf3] sm:$0xff]
          %v822 = vld [vmem:[%s500 + $0xfb] sm:$0xff]
          %v823 = vld [vmem:[%s500 + $0x10b] sm:$0xff]
          %v824 = vld [vmem:[%s500 + $0x113] sm:$0xff]
          %v825 = vld [vmem:[%s500 + $0x123] sm:$0xff]
          %v826 = vld [vmem:[%s500 + $0x12b] sm:$0xff]
          %v827 = vld [vmem:[%s500 + $0x13b] sm:$0xff]
          %v828 = vld [vmem:[%s500 + $0x143] sm:$0xff]
          %v829 = vld [vmem:[%s500 + $0x153] sm:$0xff]
          %v830 = vld [vmem:[%s500 + $0x15b] sm:$0xff]
          %v831 = vld [vmem:[%s500 + $0x16b] sm:$0xff]
          %v832 = vld [vmem:[%s500 + $0x173] sm:$0xff]
          %v833 = vlaneseq
          %v834 = vshrl.u32 %v833, 7
          %v835 = vsub.s32 3, %v834
          %v836 = vrot.slane %v498, %v835
          %v837 = vmul.f32 %v836, %v801
          %v838 = vmul.f32 %v836, %v802
          %v839 = vmul.f32 %v836, %v803
          %v840 = vmul.f32 %v836, %v804
          %v841 = vmul.f32 %v836, %v805
          %v842 = vmul.f32 %v836, %v806
          %v843 = vmul.f32 %v836, %v807
          %v844 = vmul.f32 %v836, %v808
          %v845 = vmul.f32 %v836, %v809
          %v846 = vmul.f32 %v836, %v810
          %v847 = vmul.f32 %v836, %v811
          %v848 = vmul.f32 %v836, %v812
          %v849 = vmul.f32 %v836, %v813
          %v850 = vmul.f32 %v836, %v814
          %v851 = vmul.f32 %v836, %v815
          %v852 = vmul.f32 %v836, %v816
          %v853 = vmul.f32 %v836, %v817
          %v854 = vmul.f32 %v836, %v818
          %v855 = vmul.f32 %v836, %v819
          %v856 = vmul.f32 %v836, %v820
          %v857 = vmul.f32 %v836, %v821
          %v858 = vmul.f32 %v836, %v822
          %v859 = vmul.f32 %v836, %v823
          %v860 = vmul.f32 %v836, %v824
          %v861 = vmul.f32 %v836, %v825
          %v862 = vmul.f32 %v836, %v826
          %v863 = vmul.f32 %v836, %v827
          %v864 = vmul.f32 %v836, %v828
          %v865 = vmul.f32 %v836, %v829
          %v866 = vmul.f32 %v836, %v830
          %v867 = vmul.f32 %v836, %v831
          %v868 = vmul.f32 %v836, %v832
          %v869 = vadd.f32 %v769, %v837
          %v870 = vadd.f32 %v770, %v838
          %v871 = vadd.f32 %v771, %v839
          %v872 = vadd.f32 %v772, %v840
          %v873 = vadd.f32 %v773, %v841
          %v874 = vadd.f32 %v774, %v842
          %v875 = vadd.f32 %v775, %v843
          %v876 = vadd.f32 %v776, %v844
          %v877 = vadd.f32 %v777, %v845
          %v878 = vadd.f32 %v778, %v846
          %v879 = vadd.f32 %v779, %v847
          %v880 = vadd.f32 %v780, %v848
          %v881 = vadd.f32 %v781, %v849
          %v882 = vadd.f32 %v782, %v850
          %v883 = vadd.f32 %v783, %v851
          %v884 = vadd.f32 %v784, %v852
          %v885 = vadd.f32 %v785, %v853
          %v886 = vadd.f32 %v786, %v854
          %v887 = vadd.f32 %v787, %v855
          %v888 = vadd.f32 %v788, %v856
          %v889 = vadd.f32 %v789, %v857
          %v890 = vadd.f32 %v790, %v858
          %v891 = vadd.f32 %v791, %v859
          %v892 = vadd.f32 %v792, %v860
          %v893 = vadd.f32 %v793, %v861
          %v894 = vadd.f32 %v794, %v862
          %v895 = vadd.f32 %v795, %v863
          %v896 = vadd.f32 %v796, %v864
          %v897 = vadd.f32 %v797, %v865
          %v898 = vadd.f32 %v798, %v866
          %v899 = vadd.f32 %v799, %v867
          %v900 = vadd.f32 %v800, %v868
          %v901 = vld [vmem:[%s500 + $0x4] sm:$0xff]
          %v902 = vld [vmem:[%s500 + $0xc] sm:$0xff]
          %v903 = vld [vmem:[%s500 + $0x1c] sm:$0xff]
          %v904 = vld [vmem:[%s500 + $0x24] sm:$0xff]
          %v905 = vld [vmem:[%s500 + $0x34] sm:$0xff]
          %v906 = vld [vmem:[%s500 + $0x3c] sm:$0xff]
          %v907 = vld [vmem:[%s500 + $0x4c] sm:$0xff]
          %v908 = vld [vmem:[%s500 + $0x54] sm:$0xff]
          %v909 = vld [vmem:[%s500 + $0x64] sm:$0xff]
          %v910 = vld [vmem:[%s500 + $0x6c] sm:$0xff]
          %v911 = vld [vmem:[%s500 + $0x7c] sm:$0xff]
          %v912 = vld [vmem:[%s500 + $0x84] sm:$0xff]
          %v913 = vld [vmem:[%s500 + $0x94] sm:$0xff]
          %v914 = vld [vmem:[%s500 + $0x9c] sm:$0xff]
          %v915 = vld [vmem:[%s500 + $0xac] sm:$0xff]
          %v916 = vld [vmem:[%s500 + $0xb4] sm:$0xff]
          %v917 = vld [vmem:[%s500 + $0xc4] sm:$0xff]
          %v918 = vld [vmem:[%s500 + $0xcc] sm:$0xff]
          %v919 = vld [vmem:[%s500 + $0xdc] sm:$0xff]
          %v920 = vld [vmem:[%s500 + $0xe4] sm:$0xff]
          %v921 = vld [vmem:[%s500 + $0xf4] sm:$0xff]
          %v922 = vld [vmem:[%s500 + $0xfc] sm:$0xff]
          %v923 = vld [vmem:[%s500 + $0x10c] sm:$0xff]
          %v924 = vld [vmem:[%s500 + $0x114] sm:$0xff]
          %v925 = vld [vmem:[%s500 + $0x124] sm:$0xff]
          %v926 = vld [vmem:[%s500 + $0x12c] sm:$0xff]
          %v927 = vld [vmem:[%s500 + $0x13c] sm:$0xff]
          %v928 = vld [vmem:[%s500 + $0x144] sm:$0xff]
          %v929 = vld [vmem:[%s500 + $0x154] sm:$0xff]
          %v930 = vld [vmem:[%s500 + $0x15c] sm:$0xff]
          %v931 = vld [vmem:[%s500 + $0x16c] sm:$0xff]
          %v932 = vld [vmem:[%s500 + $0x174] sm:$0xff]
          %v933 = vlaneseq
          %v934 = vshrl.u32 %v933, 7
          %v935 = vsub.s32 4, %v934
          %v936 = vrot.slane %v498, %v935
          %v937 = vmul.f32 %v936, %v901
          %v938 = vmul.f32 %v936, %v902
          %v939 = vmul.f32 %v936, %v903
          %v940 = vmul.f32 %v936, %v904
          %v941 = vmul.f32 %v936, %v905
          %v942 = vmul.f32 %v936, %v906
          %v943 = vmul.f32 %v936, %v907
          %v944 = vmul.f32 %v936, %v908
          %v945 = vmul.f32 %v936, %v909
          %v946 = vmul.f32 %v936, %v910
          %v947 = vmul.f32 %v936, %v911
          %v948 = vmul.f32 %v936, %v912
          %v949 = vmul.f32 %v936, %v913
          %v950 = vmul.f32 %v936, %v914
          %v951 = vmul.f32 %v936, %v915
          %v952 = vmul.f32 %v936, %v916
          %v953 = vmul.f32 %v936, %v917
          %v954 = vmul.f32 %v936, %v918
          %v955 = vmul.f32 %v936, %v919
          %v956 = vmul.f32 %v936, %v920
          %v957 = vmul.f32 %v936, %v921
          %v958 = vmul.f32 %v936, %v922
          %v959 = vmul.f32 %v936, %v923
          %v960 = vmul.f32 %v936, %v924
          %v961 = vmul.f32 %v936, %v925
          %v962 = vmul.f32 %v936, %v926
          %v963 = vmul.f32 %v936, %v927
          %v964 = vmul.f32 %v936, %v928
          %v965 = vmul.f32 %v936, %v929
          %v966 = vmul.f32 %v936, %v930
          %v967 = vmul.f32 %v936, %v931
          %v968 = vmul.f32 %v936, %v932
          %v969 = vadd.f32 %v869, %v937
          %v970 = vadd.f32 %v870, %v938
          %v971 = vadd.f32 %v871, %v939
          %v972 = vadd.f32 %v872, %v940
          %v973 = vadd.f32 %v873, %v941
          %v974 = vadd.f32 %v874, %v942
          %v975 = vadd.f32 %v875, %v943
          %v976 = vadd.f32 %v876, %v944
          %v977 = vadd.f32 %v877, %v945
          %v978 = vadd.f32 %v878, %v946
          %v979 = vadd.f32 %v879, %v947
          %v980 = vadd.f32 %v880, %v948
          %v981 = vadd.f32 %v881, %v949
          %v982 = vadd.f32 %v882, %v950
          %v983 = vadd.f32 %v883, %v951
          %v984 = vadd.f32 %v884, %v952
          %v985 = vadd.f32 %v885, %v953
          %v986 = vadd.f32 %v886, %v954
          %v987 = vadd.f32 %v887, %v955
          %v988 = vadd.f32 %v888, %v956
          %v989 = vadd.f32 %v889, %v957
          %v990 = vadd.f32 %v890, %v958
          %v991 = vadd.f32 %v891, %v959
          %v992 = vadd.f32 %v892, %v960
          %v993 = vadd.f32 %v893, %v961
          %v994 = vadd.f32 %v894, %v962
          %v995 = vadd.f32 %v895, %v963
          %v996 = vadd.f32 %v896, %v964
          %v997 = vadd.f32 %v897, %v965
          %v998 = vadd.f32 %v898, %v966
          %v999 = vadd.f32 %v899, %v967
          %v1000 = vadd.f32 %v900, %v968
        $region69: #{tpu_custom_call.1} parent=47 // loop_footer
          %s463 = sadd.s32 1, %s459
        $region70: #{tpu_custom_call.1} parent=47 // loop_footer_branch
          %458 = sbr.rel target = $region66
        $region71: #{tpu_custom_call.1} parent=47 // loop_exit
          _
        %1001 = vst [vmem:[#allocation3] sm:$0xff] 0.0
        %1002 = vst [vmem:[#allocation3 + $0x8] sm:$0xff] 0.0
        %1003 = vst [vmem:[#allocation3 + $0x10] sm:$0xff] 0.0
        %1004 = vst [vmem:[#allocation3 + $0x18] sm:$0xff] 0.0
        %1005 = vst [vmem:[#allocation3 + $0x20] sm:$0x3] 0.0
        %1006 = vst [vmem:[#allocation3 + $0x28] sm:$0xff] 0.0
        %1007 = vst [vmem:[#allocation3 + $0x30] sm:$0xff] 0.0
        %1008 = vst [vmem:[#allocation3 + $0x38] sm:$0xff] 0.0
        %1009 = vst [vmem:[#allocation3 + $0x40] sm:$0xff] 0.0
        %1010 = vst [vmem:[#allocation3 + $0x48] sm:$0x3] 0.0
        %1011 = vst [vmem:[#allocation3 + $0x50] sm:$0xff] 0.0
        %1012 = vst [vmem:[#allocation3 + $0x58] sm:$0xff] 0.0
        %1013 = vst [vmem:[#allocation3 + $0x60] sm:$0xff] 0.0
        %1014 = vst [vmem:[#allocation3 + $0x68] sm:$0xff] 0.0
        %1015 = vst [vmem:[#allocation3 + $0x70] sm:$0x3] 0.0
        %1016 = vst [vmem:[#allocation3 + $0x78] sm:$0xff] 0.0
        %1017 = vst [vmem:[#allocation3 + $0x80] sm:$0xff] 0.0
        %1018 = vst [vmem:[#allocation3 + $0x88] sm:$0xff] 0.0
        %1019 = vst [vmem:[#allocation3 + $0x90] sm:$0xff] 0.0
        %1020 = vst [vmem:[#allocation3 + $0x98] sm:$0x3] 0.0
        %1021 = vst [vmem:[#allocation3 + $0xa0] sm:$0xff] 0.0
        %1022 = vst [vmem:[#allocation3 + $0xa8] sm:$0xff] 0.0
        %1023 = vst [vmem:[#allocation3 + $0xb0] sm:$0xff] 0.0
        %1024 = vst [vmem:[#allocation3 + $0xb8] sm:$0xff] 0.0
        %1025 = vst [vmem:[#allocation3 + $0xc0] sm:$0x3] 0.0
        %1026 = vst [vmem:[#allocation3 + $0xc8] sm:$0xff] 0.0
        %1027 = vst [vmem:[#allocation3 + $0xd0] sm:$0xff] 0.0
        %1028 = vst [vmem:[#allocation3 + $0xd8] sm:$0xff] 0.0
        %1029 = vst [vmem:[#allocation3 + $0xe0] sm:$0xff] 0.0
        %1030 = vst [vmem:[#allocation3 + $0xe8] sm:$0x3] 0.0
        %1031 = vst [vmem:[#allocation3 + $0xf0] sm:$0xff] 0.0
        %1032 = vst [vmem:[#allocation3 + $0xf8] sm:$0xff] 0.0
        %1033 = vst [vmem:[#allocation3 + $0x100] sm:$0xff] 0.0
        %1034 = vst [vmem:[#allocation3 + $0x108] sm:$0xff] 0.0
        %1035 = vst [vmem:[#allocation3 + $0x110] sm:$0x3] 0.0
        %1036 = vst [vmem:[#allocation3 + $0x118] sm:$0xff] 0.0
        %1037 = vst [vmem:[#allocation3 + $0x120] sm:$0xff] 0.0
        %1038 = vst [vmem:[#allocation3 + $0x128] sm:$0xff] 0.0
        %1039 = vst [vmem:[#allocation3 + $0x130] sm:$0xff] 0.0
        %1040 = vst [vmem:[#allocation3 + $0x138] sm:$0x3] 0.0
        %1041 = vst [vmem:[#allocation3 + $0x140] sm:$0xff] 0.0
        %1042 = vst [vmem:[#allocation3 + $0x148] sm:$0xff] 0.0
        %1043 = vst [vmem:[#allocation3 + $0x150] sm:$0xff] 0.0
        %1044 = vst [vmem:[#allocation3 + $0x158] sm:$0xff] 0.0
        %1045 = vst [vmem:[#allocation3 + $0x160] sm:$0x3] 0.0
        %s1046 = scalar_lea.vmem [#allocation3], 1000
        %1047 = vst [vmem:[%s1046] sm:$0xff] 0.0
        %1048 = vst [vmem:[%s1046 + $0x8] sm:$0xff] 0.0
        %1049 = vst [vmem:[%s1046 + $0x10] sm:$0xff] 0.0
        %1050 = vst [vmem:[%s1046 + $0x18] sm:$0xff] 0.0
        %1051 = vst [vmem:[%s1046 + $0x20] sm:$0x3] 0.0
        %1052 = vst [vmem:[%s1046 + $0x28] sm:$0xff] 0.0
        %1053 = vst [vmem:[%s1046 + $0x30] sm:$0xff] 0.0
        %1054 = vst [vmem:[%s1046 + $0x38] sm:$0xff] 0.0
        %1055 = vst [vmem:[%s1046 + $0x40] sm:$0xff] 0.0
        %1056 = vst [vmem:[%s1046 + $0x48] sm:$0x3] 0.0
        %1057 = vst [vmem:[%s1046 + $0x50] sm:$0xff] 0.0
        %1058 = vst [vmem:[%s1046 + $0x58] sm:$0xff] 0.0
        %1059 = vst [vmem:[%s1046 + $0x60] sm:$0xff] 0.0
        %1060 = vst [vmem:[%s1046 + $0x68] sm:$0xff] 0.0
        %1061 = vst [vmem:[%s1046 + $0x70] sm:$0x3] 0.0
        %1062 = vst [vmem:[%s1046 + $0x78] sm:$0xff] 0.0
        %1063 = vst [vmem:[%s1046 + $0x80] sm:$0xff] 0.0
        %1064 = vst [vmem:[%s1046 + $0x88] sm:$0xff] 0.0
        %1065 = vst [vmem:[%s1046 + $0x90] sm:$0xff] 0.0
        %1066 = vst [vmem:[%s1046 + $0x98] sm:$0x3] 0.0
        %1067 = vst [vmem:[%s1046 + $0xa0] sm:$0xff] 0.0
        %1068 = vst [vmem:[%s1046 + $0xa8] sm:$0xff] 0.0
        %1069 = vst [vmem:[%s1046 + $0xb0] sm:$0xff] 0.0
        %1070 = vst [vmem:[%s1046 + $0xb8] sm:$0xff] 0.0
        %1071 = vst [vmem:[%s1046 + $0xc0] sm:$0x3] 0.0
        %1072 = vst [vmem:[%s1046 + $0xc8] sm:$0xff] 0.0
        %1073 = vst [vmem:[%s1046 + $0xd0] sm:$0xff] 0.0
        %1074 = vst [vmem:[%s1046 + $0xd8] sm:$0xff] 0.0
        %1075 = vst [vmem:[%s1046 + $0xe0] sm:$0xff] 0.0
        %1076 = vst [vmem:[%s1046 + $0xe8] sm:$0x3] 0.0
        %1077 = vst [vmem:[%s1046 + $0xf0] sm:$0xff] 0.0
        %1078 = vst [vmem:[%s1046 + $0xf8] sm:$0xff] 0.0
        %1079 = vst [vmem:[%s1046 + $0x100] sm:$0xff] 0.0
        %1080 = vst [vmem:[%s1046 + $0x108] sm:$0xff] 0.0
        %1081 = vst [vmem:[%s1046 + $0x110] sm:$0x3] 0.0
        %1082 = vst [vmem:[%s1046 + $0x118] sm:$0xff] 0.0
        %1083 = vst [vmem:[%s1046 + $0x120] sm:$0xff] 0.0
        %1084 = vst [vmem:[%s1046 + $0x128] sm:$0xff] 0.0
        %1085 = vst [vmem:[%s1046 + $0x130] sm:$0xff] 0.0
        %1086 = vst [vmem:[%s1046 + $0x138] sm:$0x3] 0.0
        %1087 = vst [vmem:[%s1046 + $0x140] sm:$0xff] 0.0
        %1088 = vst [vmem:[%s1046 + $0x148] sm:$0xff] 0.0
        %1089 = vst [vmem:[%s1046 + $0x150] sm:$0xff] 0.0
        %1090 = vst [vmem:[%s1046 + $0x158] sm:$0xff] 0.0
        %1091 = vst [vmem:[%s1046 + $0x160] sm:$0x3] 0.0
        %s1092 = scalar_lea.vmem [#allocation3], 360
        %1093 = vst [vmem:[%s1092] sm:$0xff] 0.0
        %1094 = vst [vmem:[%s1092 + $0x8] sm:$0x1] 0.0
        %1095 = vst [vmem:[%s1092 + $0x28] sm:$0xff] 0.0
        %1096 = vst [vmem:[%s1092 + $0x30] sm:$0x1] 0.0
        %1097 = vst [vmem:[%s1092 + $0x50] sm:$0xff] 0.0
        %1098 = vst [vmem:[%s1092 + $0x58] sm:$0x1] 0.0
        %1099 = vst [vmem:[%s1092 + $0x78] sm:$0xff] 0.0
        %1100 = vst [vmem:[%s1092 + $0x80] sm:$0x1] 0.0
        %1101 = vst [vmem:[%s1092 + $0xa0] sm:$0xff] 0.0
        %1102 = vst [vmem:[%s1092 + $0xa8] sm:$0x1] 0.0
        %1103 = vst [vmem:[%s1092 + $0xc8] sm:$0xff] 0.0
        %1104 = vst [vmem:[%s1092 + $0xd0] sm:$0x1] 0.0
        %1105 = vst [vmem:[%s1092 + $0xf0] sm:$0xff] 0.0
        %1106 = vst [vmem:[%s1092 + $0xf8] sm:$0x1] 0.0
        %1107 = vst [vmem:[%s1092 + $0x118] sm:$0xff] 0.0
        %1108 = vst [vmem:[%s1092 + $0x120] sm:$0x1] 0.0
        %1109 = vst [vmem:[%s1092 + $0x140] sm:$0xff] 0.0
        %1110 = vst [vmem:[%s1092 + $0x148] sm:$0x1] 0.0
        %1111 = vst [vmem:[%s1092 + $0x168] sm:$0xff] 0.0
        %1112 = vst [vmem:[%s1092 + $0x170] sm:$0x1] 0.0
        %1113 = vst [vmem:[%s1092 + $0x190] sm:$0xff] 0.0
        %1114 = vst [vmem:[%s1092 + $0x198] sm:$0x1] 0.0
        %1115 = vst [vmem:[%s1092 + $0x1b8] sm:$0xff] 0.0
        %1116 = vst [vmem:[%s1092 + $0x1c0] sm:$0x1] 0.0
        %1117 = vst [vmem:[%s1092 + $0x1e0] sm:$0xff] 0.0
        %1118 = vst [vmem:[%s1092 + $0x1e8] sm:$0x1] 0.0
        %1119 = vst [vmem:[%s1092 + $0x208] sm:$0xff] 0.0
        %1120 = vst [vmem:[%s1092 + $0x210] sm:$0x1] 0.0
        %1121 = vst [vmem:[%s1092 + $0x230] sm:$0xff] 0.0
        %1122 = vst [vmem:[%s1092 + $0x238] sm:$0x1] 0.0
        %1123 = vst [vmem:[%s1092 + $0x258] sm:$0xff] 0.0
        %1124 = vst [vmem:[%s1092 + $0x260] sm:$0x1] 0.0
        %1125 = vst [vmem:[%s1092 + $0x19] sm:$0xff] 0.0
        %1126 = vst [vmem:[%s1092 + $0x21] sm:$0x1] 0.0
        %1127 = vst [vmem:[%s1092 + $0x41] sm:$0xff] 0.0
        %1128 = vst [vmem:[%s1092 + $0x49] sm:$0x1] 0.0
        %1129 = vst [vmem:[%s1092 + $0x69] sm:$0xff] 0.0
        %1130 = vst [vmem:[%s1092 + $0x71] sm:$0x1] 0.0
        %1131 = vst [vmem:[%s1092 + $0x91] sm:$0xff] 0.0
        %1132 = vst [vmem:[%s1092 + $0x99] sm:$0x1] 0.0
        %1133 = vst [vmem:[%s1092 + $0xb9] sm:$0xff] 0.0
        %1134 = vst [vmem:[%s1092 + $0xc1] sm:$0x1] 0.0
        %1135 = vst [vmem:[%s1092 + $0xe1] sm:$0xff] 0.0
        %1136 = vst [vmem:[%s1092 + $0xe9] sm:$0x1] 0.0
        %1137 = vst [vmem:[%s1092 + $0x109] sm:$0xff] 0.0
        %1138 = vst [vmem:[%s1092 + $0x111] sm:$0x1] 0.0
        %1139 = vst [vmem:[%s1092 + $0x131] sm:$0xff] 0.0
        %1140 = vst [vmem:[%s1092 + $0x139] sm:$0x1] 0.0
        %1141 = vst [vmem:[%s1092 + $0x159] sm:$0xff] 0.0
        %1142 = vst [vmem:[%s1092 + $0x161] sm:$0x1] 0.0
        %1143 = vst [vmem:[%s1092 + $0x181] sm:$0xff] 0.0
        %1144 = vst [vmem:[%s1092 + $0x189] sm:$0x1] 0.0
        %1145 = vst [vmem:[%s1092 + $0x1a9] sm:$0xff] 0.0
        %1146 = vst [vmem:[%s1092 + $0x1b1] sm:$0x1] 0.0
        %1147 = vst [vmem:[%s1092 + $0x1d1] sm:$0xff] 0.0
        %1148 = vst [vmem:[%s1092 + $0x1d9] sm:$0x1] 0.0
        %1149 = vst [vmem:[%s1092 + $0x1f9] sm:$0xff] 0.0
        %1150 = vst [vmem:[%s1092 + $0x201] sm:$0x1] 0.0
        %1151 = vst [vmem:[%s1092 + $0x221] sm:$0xff] 0.0
        %1152 = vst [vmem:[%s1092 + $0x229] sm:$0x1] 0.0
        %1153 = vst [vmem:[%s1092 + $0x249] sm:$0xff] 0.0
        %1154 = vst [vmem:[%s1092 + $0x251] sm:$0x1] 0.0
        %1155 = vst [vmem:[%s1092 + $0x271] sm:$0xff] 0.0
        %1156 = vst [vmem:[%s1092 + $0x279] sm:$0x1] 0.0
        %1157 = vst [vmem:[%s1092 + $0x9] sm:$0xff] %v464
        %1158 = vst [vmem:[%s1092 + $0x11] sm:$0xff] %v465
        %1159 = vst [vmem:[%s1092 + $0x31] sm:$0xff] %v466
        %1160 = vst [vmem:[%s1092 + $0x39] sm:$0xff] %v467
        %1161 = vst [vmem:[%s1092 + $0x59] sm:$0xff] %v468
        %1162 = vst [vmem:[%s1092 + $0x61] sm:$0xff] %v469
        %1163 = vst [vmem:[%s1092 + $0x81] sm:$0xff] %v470
        %1164 = vst [vmem:[%s1092 + $0x89] sm:$0xff] %v471
        %1165 = vst [vmem:[%s1092 + $0xa9] sm:$0xff] %v472
        %1166 = vst [vmem:[%s1092 + $0xb1] sm:$0xff] %v473
        %1167 = vst [vmem:[%s1092 + $0xd1] sm:$0xff] %v474
        %1168 = vst [vmem:[%s1092 + $0xd9] sm:$0xff] %v475
        %1169 = vst [vmem:[%s1092 + $0xf9] sm:$0xff] %v476
        %1170 = vst [vmem:[%s1092 + $0x101] sm:$0xff] %v477
        %1171 = vst [vmem:[%s1092 + $0x121] sm:$0xff] %v478
        %1172 = vst [vmem:[%s1092 + $0x129] sm:$0xff] %v479
        %1173 = vst [vmem:[%s1092 + $0x149] sm:$0xff] %v480
        %1174 = vst [vmem:[%s1092 + $0x151] sm:$0xff] %v481
        %1175 = vst [vmem:[%s1092 + $0x171] sm:$0xff] %v482
        %1176 = vst [vmem:[%s1092 + $0x179] sm:$0xff] %v483
        %1177 = vst [vmem:[%s1092 + $0x199] sm:$0xff] %v484
        %1178 = vst [vmem:[%s1092 + $0x1a1] sm:$0xff] %v485
        %1179 = vst [vmem:[%s1092 + $0x1c1] sm:$0xff] %v486
        %1180 = vst [vmem:[%s1092 + $0x1c9] sm:$0xff] %v487
        %1181 = vst [vmem:[%s1092 + $0x1e9] sm:$0xff] %v488
        %1182 = vst [vmem:[%s1092 + $0x1f1] sm:$0xff] %v489
        %1183 = vst [vmem:[%s1092 + $0x211] sm:$0xff] %v490
        %1184 = vst [vmem:[%s1092 + $0x219] sm:$0xff] %v491
        %1185 = vst [vmem:[%s1092 + $0x239] sm:$0xff] %v492
        %1186 = vst [vmem:[%s1092 + $0x241] sm:$0xff] %v493
        %1187 = vst [vmem:[%s1092 + $0x261] sm:$0xff] %v494
        %1188 = vst [vmem:[%s1092 + $0x269] sm:$0xff] %v495
        %v1189 = vld [vmem:[%s4] sm:$0x1]
        %v1191 = vlaneseq
        %v1192 = vshrl.u32 %v1191, 7
        %v1193 = vsub.s32 0, %v1192
        %v1194 = vrot.slane %v1189, %v1193
        loop: start=0, step=1, limit=7
        $region72: #{tpu_custom_call.1} parent=47 // loop_pre_header
          _
        $region73: #{tpu_custom_call.1} parent=47 // loop_header
          %s1197 = sphi 0, %s1201
          %p1198 = scmp.ge.s32.totalorder %s1197, 7
          %v1202 = vphi %v1194, %v1908
          %v1203 = vphi %v1194, %v1909
          %v1204 = vphi %v1194, %v1910
          %v1205 = vphi %v1194, %v1911
          %v1206 = vphi %v1194, %v1912
          %v1207 = vphi %v1194, %v1913
          %v1208 = vphi %v1194, %v1914
          %v1209 = vphi %v1194, %v1915
          %v1210 = vphi %v1194, %v1916
          %v1211 = vphi %v1194, %v1917
          %v1212 = vphi %v1194, %v1918
          %v1213 = vphi %v1194, %v1919
          %v1214 = vphi %v1194, %v1920
          %v1215 = vphi %v1194, %v1921
          %v1216 = vphi %v1194, %v1922
          %v1217 = vphi %v1194, %v1923
          %v1218 = vphi %v1194, %v1924
          %v1219 = vphi %v1194, %v1925
          %v1220 = vphi %v1194, %v1926
          %v1221 = vphi %v1194, %v1927
          %v1222 = vphi %v1194, %v1928
          %v1223 = vphi %v1194, %v1929
          %v1224 = vphi %v1194, %v1930
          %v1225 = vphi %v1194, %v1931
          %v1226 = vphi %v1194, %v1932
          %v1227 = vphi %v1194, %v1933
          %v1228 = vphi %v1194, %v1934
          %v1229 = vphi %v1194, %v1935
          %v1230 = vphi %v1194, %v1936
          %v1231 = vphi %v1194, %v1937
          %v1232 = vphi %v1194, %v1938
          %v1233 = vphi %v1194, %v1939
        $region74: #{tpu_custom_call.1} parent=47 // loop_header_branch
          %1200 = sbr.rel (%p1198) target = $region78
        $region75: #{tpu_custom_call.1} parent=47 // loop_body
          %s1234 = smul.u32 %s1197, 8
          %s1235 = scalar_lea.vmem [#allocation9], %s1234
          %v1236 = vld [vmem:[%s1235] sm:$0x7f]
          %s1237 = smul.u32 %s1197, 3
          %s1238 = smul.u32 %s1237, 40
          %s1239 = scalar_lea.vmem [#allocation3], %s1238
          %v1240 = vld [vmem:[%s1239] sm:$0xff]
          %v1241 = vld [vmem:[%s1239 + $0x8] sm:$0xff]
          %v1242 = vld [vmem:[%s1239 + $0x28] sm:$0xff]
          %v1243 = vld [vmem:[%s1239 + $0x30] sm:$0xff]
          %v1244 = vld [vmem:[%s1239 + $0x50] sm:$0xff]
          %v1245 = vld [vmem:[%s1239 + $0x58] sm:$0xff]
          %v1246 = vld [vmem:[%s1239 + $0x78] sm:$0xff]
          %v1247 = vld [vmem:[%s1239 + $0x80] sm:$0xff]
          %v1248 = vld [vmem:[%s1239 + $0xa0] sm:$0xff]
          %v1249 = vld [vmem:[%s1239 + $0xa8] sm:$0xff]
          %v1250 = vld [vmem:[%s1239 + $0xc8] sm:$0xff]
          %v1251 = vld [vmem:[%s1239 + $0xd0] sm:$0xff]
          %v1252 = vld [vmem:[%s1239 + $0xf0] sm:$0xff]
          %v1253 = vld [vmem:[%s1239 + $0xf8] sm:$0xff]
          %v1254 = vld [vmem:[%s1239 + $0x118] sm:$0xff]
          %v1255 = vld [vmem:[%s1239 + $0x120] sm:$0xff]
          %v1256 = vld [vmem:[%s1239 + $0x140] sm:$0xff]
          %v1257 = vld [vmem:[%s1239 + $0x148] sm:$0xff]
          %v1258 = vld [vmem:[%s1239 + $0x168] sm:$0xff]
          %v1259 = vld [vmem:[%s1239 + $0x170] sm:$0xff]
          %v1260 = vld [vmem:[%s1239 + $0x190] sm:$0xff]
          %v1261 = vld [vmem:[%s1239 + $0x198] sm:$0xff]
          %v1262 = vld [vmem:[%s1239 + $0x1b8] sm:$0xff]
          %v1263 = vld [vmem:[%s1239 + $0x1c0] sm:$0xff]
          %v1264 = vld [vmem:[%s1239 + $0x1e0] sm:$0xff]
          %v1265 = vld [vmem:[%s1239 + $0x1e8] sm:$0xff]
          %v1266 = vld [vmem:[%s1239 + $0x208] sm:$0xff]
          %v1267 = vld [vmem:[%s1239 + $0x210] sm:$0xff]
          %v1268 = vld [vmem:[%s1239 + $0x230] sm:$0xff]
          %v1269 = vld [vmem:[%s1239 + $0x238] sm:$0xff]
          %v1270 = vld [vmem:[%s1239 + $0x258] sm:$0xff]
          %v1271 = vld [vmem:[%s1239 + $0x260] sm:$0xff]
          %v1272 = vlaneseq
          %v1273 = vshrl.u32 %v1272, 7
          %v1274 = vsub.s32 0, %v1273
          %v1275 = vrot.slane %v1236, %v1274
          %v1276 = vmul.f32 %v1275, %v1240
          %v1277 = vmul.f32 %v1275, %v1241
          %v1278 = vmul.f32 %v1275, %v1242
          %v1279 = vmul.f32 %v1275, %v1243
          %v1280 = vmul.f32 %v1275, %v1244
          %v1281 = vmul.f32 %v1275, %v1245
          %v1282 = vmul.f32 %v1275, %v1246
          %v1283 = vmul.f32 %v1275, %v1247
          %v1284 = vmul.f32 %v1275, %v1248
          %v1285 = vmul.f32 %v1275, %v1249
          %v1286 = vmul.f32 %v1275, %v1250
          %v1287 = vmul.f32 %v1275, %v1251
          %v1288 = vmul.f32 %v1275, %v1252
          %v1289 = vmul.f32 %v1275, %v1253
          %v1290 = vmul.f32 %v1275, %v1254
          %v1291 = vmul.f32 %v1275, %v1255
          %v1292 = vmul.f32 %v1275, %v1256
          %v1293 = vmul.f32 %v1275, %v1257
          %v1294 = vmul.f32 %v1275, %v1258
          %v1295 = vmul.f32 %v1275, %v1259
          %v1296 = vmul.f32 %v1275, %v1260
          %v1297 = vmul.f32 %v1275, %v1261
          %v1298 = vmul.f32 %v1275, %v1262
          %v1299 = vmul.f32 %v1275, %v1263
          %v1300 = vmul.f32 %v1275, %v1264
          %v1301 = vmul.f32 %v1275, %v1265
          %v1302 = vmul.f32 %v1275, %v1266
          %v1303 = vmul.f32 %v1275, %v1267
          %v1304 = vmul.f32 %v1275, %v1268
          %v1305 = vmul.f32 %v1275, %v1269
          %v1306 = vmul.f32 %v1275, %v1270
          %v1307 = vmul.f32 %v1275, %v1271
          %v1308 = vadd.f32 %v1202, %v1276
          %v1309 = vadd.f32 %v1203, %v1277
          %v1310 = vadd.f32 %v1204, %v1278
          %v1311 = vadd.f32 %v1205, %v1279
          %v1312 = vadd.f32 %v1206, %v1280
          %v1313 = vadd.f32 %v1207, %v1281
          %v1314 = vadd.f32 %v1208, %v1282
          %v1315 = vadd.f32 %v1209, %v1283
          %v1316 = vadd.f32 %v1210, %v1284
          %v1317 = vadd.f32 %v1211, %v1285
          %v1318 = vadd.f32 %v1212, %v1286
          %v1319 = vadd.f32 %v1213, %v1287
          %v1320 = vadd.f32 %v1214, %v1288
          %v1321 = vadd.f32 %v1215, %v1289
          %v1322 = vadd.f32 %v1216, %v1290
          %v1323 = vadd.f32 %v1217, %v1291
          %v1324 = vadd.f32 %v1218, %v1292
          %v1325 = vadd.f32 %v1219, %v1293
          %v1326 = vadd.f32 %v1220, %v1294
          %v1327 = vadd.f32 %v1221, %v1295
          %v1328 = vadd.f32 %v1222, %v1296
          %v1329 = vadd.f32 %v1223, %v1297
          %v1330 = vadd.f32 %v1224, %v1298
          %v1331 = vadd.f32 %v1225, %v1299
          %v1332 = vadd.f32 %v1226, %v1300
          %v1333 = vadd.f32 %v1227, %v1301
          %v1334 = vadd.f32 %v1228, %v1302
          %v1335 = vadd.f32 %v1229, %v1303
          %v1336 = vadd.f32 %v1230, %v1304
          %v1337 = vadd.f32 %v1231, %v1305
          %v1338 = vadd.f32 %v1232, %v1306
          %v1339 = vadd.f32 %v1233, %v1307
          %v1340 = vld [vmem:[%s1239 + $0x3] sm:$0xff]
          %v1341 = vld [vmem:[%s1239 + $0xb] sm:$0xff]
          %v1342 = vld [vmem:[%s1239 + $0x2b] sm:$0xff]
          %v1343 = vld [vmem:[%s1239 + $0x33] sm:$0xff]
          %v1344 = vld [vmem:[%s1239 + $0x53] sm:$0xff]
          %v1345 = vld [vmem:[%s1239 + $0x5b] sm:$0xff]
          %v1346 = vld [vmem:[%s1239 + $0x7b] sm:$0xff]
          %v1347 = vld [vmem:[%s1239 + $0x83] sm:$0xff]
          %v1348 = vld [vmem:[%s1239 + $0xa3] sm:$0xff]
          %v1349 = vld [vmem:[%s1239 + $0xab] sm:$0xff]
          %v1350 = vld [vmem:[%s1239 + $0xcb] sm:$0xff]
          %v1351 = vld [vmem:[%s1239 + $0xd3] sm:$0xff]
          %v1352 = vld [vmem:[%s1239 + $0xf3] sm:$0xff]
          %v1353 = vld [vmem:[%s1239 + $0xfb] sm:$0xff]
          %v1354 = vld [vmem:[%s1239 + $0x11b] sm:$0xff]
          %v1355 = vld [vmem:[%s1239 + $0x123] sm:$0xff]
          %v1356 = vld [vmem:[%s1239 + $0x143] sm:$0xff]
          %v1357 = vld [vmem:[%s1239 + $0x14b] sm:$0xff]
          %v1358 = vld [vmem:[%s1239 + $0x16b] sm:$0xff]
          %v1359 = vld [vmem:[%s1239 + $0x173] sm:$0xff]
          %v1360 = vld [vmem:[%s1239 + $0x193] sm:$0xff]
          %v1361 = vld [vmem:[%s1239 + $0x19b] sm:$0xff]
          %v1362 = vld [vmem:[%s1239 + $0x1bb] sm:$0xff]
          %v1363 = vld [vmem:[%s1239 + $0x1c3] sm:$0xff]
          %v1364 = vld [vmem:[%s1239 + $0x1e3] sm:$0xff]
          %v1365 = vld [vmem:[%s1239 + $0x1eb] sm:$0xff]
          %v1366 = vld [vmem:[%s1239 + $0x20b] sm:$0xff]
          %v1367 = vld [vmem:[%s1239 + $0x213] sm:$0xff]
          %v1368 = vld [vmem:[%s1239 + $0x233] sm:$0xff]
          %v1369 = vld [vmem:[%s1239 + $0x23b] sm:$0xff]
          %v1370 = vld [vmem:[%s1239 + $0x25b] sm:$0xff]
          %v1371 = vld [vmem:[%s1239 + $0x263] sm:$0xff]
          %v1372 = vlaneseq
          %v1373 = vshrl.u32 %v1372, 7
          %v1374 = vsub.s32 1, %v1373
          %v1375 = vrot.slane %v1236, %v1374
          %v1376 = vmul.f32 %v1375, %v1340
          %v1377 = vmul.f32 %v1375, %v1341
          %v1378 = vmul.f32 %v1375, %v1342
          %v1379 = vmul.f32 %v1375, %v1343
          %v1380 = vmul.f32 %v1375, %v1344
          %v1381 = vmul.f32 %v1375, %v1345
          %v1382 = vmul.f32 %v1375, %v1346
          %v1383 = vmul.f32 %v1375, %v1347
          %v1384 = vmul.f32 %v1375, %v1348
          %v1385 = vmul.f32 %v1375, %v1349
          %v1386 = vmul.f32 %v1375, %v1350
          %v1387 = vmul.f32 %v1375, %v1351
          %v1388 = vmul.f32 %v1375, %v1352
          %v1389 = vmul.f32 %v1375, %v1353
          %v1390 = vmul.f32 %v1375, %v1354
          %v1391 = vmul.f32 %v1375, %v1355
          %v1392 = vmul.f32 %v1375, %v1356
          %v1393 = vmul.f32 %v1375, %v1357
          %v1394 = vmul.f32 %v1375, %v1358
          %v1395 = vmul.f32 %v1375, %v1359
          %v1396 = vmul.f32 %v1375, %v1360
          %v1397 = vmul.f32 %v1375, %v1361
          %v1398 = vmul.f32 %v1375, %v1362
          %v1399 = vmul.f32 %v1375, %v1363
          %v1400 = vmul.f32 %v1375, %v1364
          %v1401 = vmul.f32 %v1375, %v1365
          %v1402 = vmul.f32 %v1375, %v1366
          %v1403 = vmul.f32 %v1375, %v1367
          %v1404 = vmul.f32 %v1375, %v1368
          %v1405 = vmul.f32 %v1375, %v1369
          %v1406 = vmul.f32 %v1375, %v1370
          %v1407 = vmul.f32 %v1375, %v1371
          %v1408 = vadd.f32 %v1308, %v1376
          %v1409 = vadd.f32 %v1309, %v1377
          %v1410 = vadd.f32 %v1310, %v1378
          %v1411 = vadd.f32 %v1311, %v1379
          %v1412 = vadd.f32 %v1312, %v1380
          %v1413 = vadd.f32 %v1313, %v1381
          %v1414 = vadd.f32 %v1314, %v1382
          %v1415 = vadd.f32 %v1315, %v1383
          %v1416 = vadd.f32 %v1316, %v1384
          %v1417 = vadd.f32 %v1317, %v1385
          %v1418 = vadd.f32 %v1318, %v1386
          %v1419 = vadd.f32 %v1319, %v1387
          %v1420 = vadd.f32 %v1320, %v1388
          %v1421 = vadd.f32 %v1321, %v1389
          %v1422 = vadd.f32 %v1322, %v1390
          %v1423 = vadd.f32 %v1323, %v1391
          %v1424 = vadd.f32 %v1324, %v1392
          %v1425 = vadd.f32 %v1325, %v1393
          %v1426 = vadd.f32 %v1326, %v1394
          %v1427 = vadd.f32 %v1327, %v1395
          %v1428 = vadd.f32 %v1328, %v1396
          %v1429 = vadd.f32 %v1329, %v1397
          %v1430 = vadd.f32 %v1330, %v1398
          %v1431 = vadd.f32 %v1331, %v1399
          %v1432 = vadd.f32 %v1332, %v1400
          %v1433 = vadd.f32 %v1333, %v1401
          %v1434 = vadd.f32 %v1334, %v1402
          %v1435 = vadd.f32 %v1335, %v1403
          %v1436 = vadd.f32 %v1336, %v1404
          %v1437 = vadd.f32 %v1337, %v1405
          %v1438 = vadd.f32 %v1338, %v1406
          %v1439 = vadd.f32 %v1339, %v1407
          %v1440 = vld [vmem:[%s1239 + $0x6] sm:$0xff]
          %v1441 = vld [vmem:[%s1239 + $0xe] sm:$0xff]
          %v1442 = vld [vmem:[%s1239 + $0x2e] sm:$0xff]
          %v1443 = vld [vmem:[%s1239 + $0x36] sm:$0xff]
          %v1444 = vld [vmem:[%s1239 + $0x56] sm:$0xff]
          %v1445 = vld [vmem:[%s1239 + $0x5e] sm:$0xff]
          %v1446 = vld [vmem:[%s1239 + $0x7e] sm:$0xff]
          %v1447 = vld [vmem:[%s1239 + $0x86] sm:$0xff]
          %v1448 = vld [vmem:[%s1239 + $0xa6] sm:$0xff]
          %v1449 = vld [vmem:[%s1239 + $0xae] sm:$0xff]
          %v1450 = vld [vmem:[%s1239 + $0xce] sm:$0xff]
          %v1451 = vld [vmem:[%s1239 + $0xd6] sm:$0xff]
          %v1452 = vld [vmem:[%s1239 + $0xf6] sm:$0xff]
          %v1453 = vld [vmem:[%s1239 + $0xfe] sm:$0xff]
          %v1454 = vld [vmem:[%s1239 + $0x11e] sm:$0xff]
          %v1455 = vld [vmem:[%s1239 + $0x126] sm:$0xff]
          %v1456 = vld [vmem:[%s1239 + $0x146] sm:$0xff]
          %v1457 = vld [vmem:[%s1239 + $0x14e] sm:$0xff]
          %v1458 = vld [vmem:[%s1239 + $0x16e] sm:$0xff]
          %v1459 = vld [vmem:[%s1239 + $0x176] sm:$0xff]
          %v1460 = vld [vmem:[%s1239 + $0x196] sm:$0xff]
          %v1461 = vld [vmem:[%s1239 + $0x19e] sm:$0xff]
          %v1462 = vld [vmem:[%s1239 + $0x1be] sm:$0xff]
          %v1463 = vld [vmem:[%s1239 + $0x1c6] sm:$0xff]
          %v1464 = vld [vmem:[%s1239 + $0x1e6] sm:$0xff]
          %v1465 = vld [vmem:[%s1239 + $0x1ee] sm:$0xff]
          %v1466 = vld [vmem:[%s1239 + $0x20e] sm:$0xff]
          %v1467 = vld [vmem:[%s1239 + $0x216] sm:$0xff]
          %v1468 = vld [vmem:[%s1239 + $0x236] sm:$0xff]
          %v1469 = vld [vmem:[%s1239 + $0x23e] sm:$0xff]
          %v1470 = vld [vmem:[%s1239 + $0x25e] sm:$0xff]
          %v1471 = vld [vmem:[%s1239 + $0x266] sm:$0xff]
          %v1472 = vlaneseq
          %v1473 = vshrl.u32 %v1472, 7
          %v1474 = vsub.s32 2, %v1473
          %v1475 = vrot.slane %v1236, %v1474
          %v1476 = vmul.f32 %v1475, %v1440
          %v1477 = vmul.f32 %v1475, %v1441
          %v1478 = vmul.f32 %v1475, %v1442
          %v1479 = vmul.f32 %v1475, %v1443
          %v1480 = vmul.f32 %v1475, %v1444
          %v1481 = vmul.f32 %v1475, %v1445
          %v1482 = vmul.f32 %v1475, %v1446
          %v1483 = vmul.f32 %v1475, %v1447
          %v1484 = vmul.f32 %v1475, %v1448
          %v1485 = vmul.f32 %v1475, %v1449
          %v1486 = vmul.f32 %v1475, %v1450
          %v1487 = vmul.f32 %v1475, %v1451
          %v1488 = vmul.f32 %v1475, %v1452
          %v1489 = vmul.f32 %v1475, %v1453
          %v1490 = vmul.f32 %v1475, %v1454
          %v1491 = vmul.f32 %v1475, %v1455
          %v1492 = vmul.f32 %v1475, %v1456
          %v1493 = vmul.f32 %v1475, %v1457
          %v1494 = vmul.f32 %v1475, %v1458
          %v1495 = vmul.f32 %v1475, %v1459
          %v1496 = vmul.f32 %v1475, %v1460
          %v1497 = vmul.f32 %v1475, %v1461
          %v1498 = vmul.f32 %v1475, %v1462
          %v1499 = vmul.f32 %v1475, %v1463
          %v1500 = vmul.f32 %v1475, %v1464
          %v1501 = vmul.f32 %v1475, %v1465
          %v1502 = vmul.f32 %v1475, %v1466
          %v1503 = vmul.f32 %v1475, %v1467
          %v1504 = vmul.f32 %v1475, %v1468
          %v1505 = vmul.f32 %v1475, %v1469
          %v1506 = vmul.f32 %v1475, %v1470
          %v1507 = vmul.f32 %v1475, %v1471
          %v1508 = vadd.f32 %v1408, %v1476
          %v1509 = vadd.f32 %v1409, %v1477
          %v1510 = vadd.f32 %v1410, %v1478
          %v1511 = vadd.f32 %v1411, %v1479
          %v1512 = vadd.f32 %v1412, %v1480
          %v1513 = vadd.f32 %v1413, %v1481
          %v1514 = vadd.f32 %v1414, %v1482
          %v1515 = vadd.f32 %v1415, %v1483
          %v1516 = vadd.f32 %v1416, %v1484
          %v1517 = vadd.f32 %v1417, %v1485
          %v1518 = vadd.f32 %v1418, %v1486
          %v1519 = vadd.f32 %v1419, %v1487
          %v1520 = vadd.f32 %v1420, %v1488
          %v1521 = vadd.f32 %v1421, %v1489
          %v1522 = vadd.f32 %v1422, %v1490
          %v1523 = vadd.f32 %v1423, %v1491
          %v1524 = vadd.f32 %v1424, %v1492
          %v1525 = vadd.f32 %v1425, %v1493
          %v1526 = vadd.f32 %v1426, %v1494
          %v1527 = vadd.f32 %v1427, %v1495
          %v1528 = vadd.f32 %v1428, %v1496
          %v1529 = vadd.f32 %v1429, %v1497
          %v1530 = vadd.f32 %v1430, %v1498
          %v1531 = vadd.f32 %v1431, %v1499
          %v1532 = vadd.f32 %v1432, %v1500
          %v1533 = vadd.f32 %v1433, %v1501
          %v1534 = vadd.f32 %v1434, %v1502
          %v1535 = vadd.f32 %v1435, %v1503
          %v1536 = vadd.f32 %v1436, %v1504
          %v1537 = vadd.f32 %v1437, %v1505
          %v1538 = vadd.f32 %v1438, %v1506
          %v1539 = vadd.f32 %v1439, %v1507
          %v1540 = vld [vmem:[%s1239 + $0x9] sm:$0xff]
          %v1541 = vld [vmem:[%s1239 + $0x11] sm:$0xff]
          %v1542 = vld [vmem:[%s1239 + $0x31] sm:$0xff]
          %v1543 = vld [vmem:[%s1239 + $0x39] sm:$0xff]
          %v1544 = vld [vmem:[%s1239 + $0x59] sm:$0xff]
          %v1545 = vld [vmem:[%s1239 + $0x61] sm:$0xff]
          %v1546 = vld [vmem:[%s1239 + $0x81] sm:$0xff]
          %v1547 = vld [vmem:[%s1239 + $0x89] sm:$0xff]
          %v1548 = vld [vmem:[%s1239 + $0xa9] sm:$0xff]
          %v1549 = vld [vmem:[%s1239 + $0xb1] sm:$0xff]
          %v1550 = vld [vmem:[%s1239 + $0xd1] sm:$0xff]
          %v1551 = vld [vmem:[%s1239 + $0xd9] sm:$0xff]
          %v1552 = vld [vmem:[%s1239 + $0xf9] sm:$0xff]
          %v1553 = vld [vmem:[%s1239 + $0x101] sm:$0xff]
          %v1554 = vld [vmem:[%s1239 + $0x121] sm:$0xff]
          %v1555 = vld [vmem:[%s1239 + $0x129] sm:$0xff]
          %v1556 = vld [vmem:[%s1239 + $0x149] sm:$0xff]
          %v1557 = vld [vmem:[%s1239 + $0x151] sm:$0xff]
          %v1558 = vld [vmem:[%s1239 + $0x171] sm:$0xff]
          %v1559 = vld [vmem:[%s1239 + $0x179] sm:$0xff]
          %v1560 = vld [vmem:[%s1239 + $0x199] sm:$0xff]
          %v1561 = vld [vmem:[%s1239 + $0x1a1] sm:$0xff]
          %v1562 = vld [vmem:[%s1239 + $0x1c1] sm:$0xff]
          %v1563 = vld [vmem:[%s1239 + $0x1c9] sm:$0xff]
          %v1564 = vld [vmem:[%s1239 + $0x1e9] sm:$0xff]
          %v1565 = vld [vmem:[%s1239 + $0x1f1] sm:$0xff]
          %v1566 = vld [vmem:[%s1239 + $0x211] sm:$0xff]
          %v1567 = vld [vmem:[%s1239 + $0x219] sm:$0xff]
          %v1568 = vld [vmem:[%s1239 + $0x239] sm:$0xff]
          %v1569 = vld [vmem:[%s1239 + $0x241] sm:$0xff]
          %v1570 = vld [vmem:[%s1239 + $0x261] sm:$0xff]
          %v1571 = vld [vmem:[%s1239 + $0x269] sm:$0xff]
          %v1572 = vlaneseq
          %v1573 = vshrl.u32 %v1572, 7
          %v1574 = vsub.s32 3, %v1573
          %v1575 = vrot.slane %v1236, %v1574
          %v1576 = vmul.f32 %v1575, %v1540
          %v1577 = vmul.f32 %v1575, %v1541
          %v1578 = vmul.f32 %v1575, %v1542
          %v1579 = vmul.f32 %v1575, %v1543
          %v1580 = vmul.f32 %v1575, %v1544
          %v1581 = vmul.f32 %v1575, %v1545
          %v1582 = vmul.f32 %v1575, %v1546
          %v1583 = vmul.f32 %v1575, %v1547
          %v1584 = vmul.f32 %v1575, %v1548
          %v1585 = vmul.f32 %v1575, %v1549
          %v1586 = vmul.f32 %v1575, %v1550
          %v1587 = vmul.f32 %v1575, %v1551
          %v1588 = vmul.f32 %v1575, %v1552
          %v1589 = vmul.f32 %v1575, %v1553
          %v1590 = vmul.f32 %v1575, %v1554
          %v1591 = vmul.f32 %v1575, %v1555
          %v1592 = vmul.f32 %v1575, %v1556
          %v1593 = vmul.f32 %v1575, %v1557
          %v1594 = vmul.f32 %v1575, %v1558
          %v1595 = vmul.f32 %v1575, %v1559
          %v1596 = vmul.f32 %v1575, %v1560
          %v1597 = vmul.f32 %v1575, %v1561
          %v1598 = vmul.f32 %v1575, %v1562
          %v1599 = vmul.f32 %v1575, %v1563
          %v1600 = vmul.f32 %v1575, %v1564
          %v1601 = vmul.f32 %v1575, %v1565
          %v1602 = vmul.f32 %v1575, %v1566
          %v1603 = vmul.f32 %v1575, %v1567
          %v1604 = vmul.f32 %v1575, %v1568
          %v1605 = vmul.f32 %v1575, %v1569
          %v1606 = vmul.f32 %v1575, %v1570
          %v1607 = vmul.f32 %v1575, %v1571
          %v1608 = vadd.f32 %v1508, %v1576
          %v1609 = vadd.f32 %v1509, %v1577
          %v1610 = vadd.f32 %v1510, %v1578
          %v1611 = vadd.f32 %v1511, %v1579
          %v1612 = vadd.f32 %v1512, %v1580
          %v1613 = vadd.f32 %v1513, %v1581
          %v1614 = vadd.f32 %v1514, %v1582
          %v1615 = vadd.f32 %v1515, %v1583
          %v1616 = vadd.f32 %v1516, %v1584
          %v1617 = vadd.f32 %v1517, %v1585
          %v1618 = vadd.f32 %v1518, %v1586
          %v1619 = vadd.f32 %v1519, %v1587
          %v1620 = vadd.f32 %v1520, %v1588
          %v1621 = vadd.f32 %v1521, %v1589
          %v1622 = vadd.f32 %v1522, %v1590
          %v1623 = vadd.f32 %v1523, %v1591
          %v1624 = vadd.f32 %v1524, %v1592
          %v1625 = vadd.f32 %v1525, %v1593
          %v1626 = vadd.f32 %v1526, %v1594
          %v1627 = vadd.f32 %v1527, %v1595
          %v1628 = vadd.f32 %v1528, %v1596
          %v1629 = vadd.f32 %v1529, %v1597
          %v1630 = vadd.f32 %v1530, %v1598
          %v1631 = vadd.f32 %v1531, %v1599
          %v1632 = vadd.f32 %v1532, %v1600
          %v1633 = vadd.f32 %v1533, %v1601
          %v1634 = vadd.f32 %v1534, %v1602
          %v1635 = vadd.f32 %v1535, %v1603
          %v1636 = vadd.f32 %v1536, %v1604
          %v1637 = vadd.f32 %v1537, %v1605
          %v1638 = vadd.f32 %v1538, %v1606
          %v1639 = vadd.f32 %v1539, %v1607
          %v1640 = vld [vmem:[%s1239 + $0xc] sm:$0xff]
          %v1641 = vld [vmem:[%s1239 + $0x14] sm:$0xff]
          %v1642 = vld [vmem:[%s1239 + $0x34] sm:$0xff]
          %v1643 = vld [vmem:[%s1239 + $0x3c] sm:$0xff]
          %v1644 = vld [vmem:[%s1239 + $0x5c] sm:$0xff]
          %v1645 = vld [vmem:[%s1239 + $0x64] sm:$0xff]
          %v1646 = vld [vmem:[%s1239 + $0x84] sm:$0xff]
          %v1647 = vld [vmem:[%s1239 + $0x8c] sm:$0xff]
          %v1648 = vld [vmem:[%s1239 + $0xac] sm:$0xff]
          %v1649 = vld [vmem:[%s1239 + $0xb4] sm:$0xff]
          %v1650 = vld [vmem:[%s1239 + $0xd4] sm:$0xff]
          %v1651 = vld [vmem:[%s1239 + $0xdc] sm:$0xff]
          %v1652 = vld [vmem:[%s1239 + $0xfc] sm:$0xff]
          %v1653 = vld [vmem:[%s1239 + $0x104] sm:$0xff]
          %v1654 = vld [vmem:[%s1239 + $0x124] sm:$0xff]
          %v1655 = vld [vmem:[%s1239 + $0x12c] sm:$0xff]
          %v1656 = vld [vmem:[%s1239 + $0x14c] sm:$0xff]
          %v1657 = vld [vmem:[%s1239 + $0x154] sm:$0xff]
          %v1658 = vld [vmem:[%s1239 + $0x174] sm:$0xff]
          %v1659 = vld [vmem:[%s1239 + $0x17c] sm:$0xff]
          %v1660 = vld [vmem:[%s1239 + $0x19c] sm:$0xff]
          %v1661 = vld [vmem:[%s1239 + $0x1a4] sm:$0xff]
          %v1662 = vld [vmem:[%s1239 + $0x1c4] sm:$0xff]
          %v1663 = vld [vmem:[%s1239 + $0x1cc] sm:$0xff]
          %v1664 = vld [vmem:[%s1239 + $0x1ec] sm:$0xff]
          %v1665 = vld [vmem:[%s1239 + $0x1f4] sm:$0xff]
          %v1666 = vld [vmem:[%s1239 + $0x214] sm:$0xff]
          %v1667 = vld [vmem:[%s1239 + $0x21c] sm:$0xff]
          %v1668 = vld [vmem:[%s1239 + $0x23c] sm:$0xff]
          %v1669 = vld [vmem:[%s1239 + $0x244] sm:$0xff]
          %v1670 = vld [vmem:[%s1239 + $0x264] sm:$0xff]
          %v1671 = vld [vmem:[%s1239 + $0x26c] sm:$0xff]
          %v1672 = vlaneseq
          %v1673 = vshrl.u32 %v1672, 7
          %v1674 = vsub.s32 4, %v1673
          %v1675 = vrot.slane %v1236, %v1674
          %v1676 = vmul.f32 %v1675, %v1640
          %v1677 = vmul.f32 %v1675, %v1641
          %v1678 = vmul.f32 %v1675, %v1642
          %v1679 = vmul.f32 %v1675, %v1643
          %v1680 = vmul.f32 %v1675, %v1644
          %v1681 = vmul.f32 %v1675, %v1645
          %v1682 = vmul.f32 %v1675, %v1646
          %v1683 = vmul.f32 %v1675, %v1647
          %v1684 = vmul.f32 %v1675, %v1648
          %v1685 = vmul.f32 %v1675, %v1649
          %v1686 = vmul.f32 %v1675, %v1650
          %v1687 = vmul.f32 %v1675, %v1651
          %v1688 = vmul.f32 %v1675, %v1652
          %v1689 = vmul.f32 %v1675, %v1653
          %v1690 = vmul.f32 %v1675, %v1654
          %v1691 = vmul.f32 %v1675, %v1655
          %v1692 = vmul.f32 %v1675, %v1656
          %v1693 = vmul.f32 %v1675, %v1657
          %v1694 = vmul.f32 %v1675, %v1658
          %v1695 = vmul.f32 %v1675, %v1659
          %v1696 = vmul.f32 %v1675, %v1660
          %v1697 = vmul.f32 %v1675, %v1661
          %v1698 = vmul.f32 %v1675, %v1662
          %v1699 = vmul.f32 %v1675, %v1663
          %v1700 = vmul.f32 %v1675, %v1664
          %v1701 = vmul.f32 %v1675, %v1665
          %v1702 = vmul.f32 %v1675, %v1666
          %v1703 = vmul.f32 %v1675, %v1667
          %v1704 = vmul.f32 %v1675, %v1668
          %v1705 = vmul.f32 %v1675, %v1669
          %v1706 = vmul.f32 %v1675, %v1670
          %v1707 = vmul.f32 %v1675, %v1671
          %v1708 = vadd.f32 %v1608, %v1676
          %v1709 = vadd.f32 %v1609, %v1677
          %v1710 = vadd.f32 %v1610, %v1678
          %v1711 = vadd.f32 %v1611, %v1679
          %v1712 = vadd.f32 %v1612, %v1680
          %v1713 = vadd.f32 %v1613, %v1681
          %v1714 = vadd.f32 %v1614, %v1682
          %v1715 = vadd.f32 %v1615, %v1683
          %v1716 = vadd.f32 %v1616, %v1684
          %v1717 = vadd.f32 %v1617, %v1685
          %v1718 = vadd.f32 %v1618, %v1686
          %v1719 = vadd.f32 %v1619, %v1687
          %v1720 = vadd.f32 %v1620, %v1688
          %v1721 = vadd.f32 %v1621, %v1689
          %v1722 = vadd.f32 %v1622, %v1690
          %v1723 = vadd.f32 %v1623, %v1691
          %v1724 = vadd.f32 %v1624, %v1692
          %v1725 = vadd.f32 %v1625, %v1693
          %v1726 = vadd.f32 %v1626, %v1694
          %v1727 = vadd.f32 %v1627, %v1695
          %v1728 = vadd.f32 %v1628, %v1696
          %v1729 = vadd.f32 %v1629, %v1697
          %v1730 = vadd.f32 %v1630, %v1698
          %v1731 = vadd.f32 %v1631, %v1699
          %v1732 = vadd.f32 %v1632, %v1700
          %v1733 = vadd.f32 %v1633, %v1701
          %v1734 = vadd.f32 %v1634, %v1702
          %v1735 = vadd.f32 %v1635, %v1703
          %v1736 = vadd.f32 %v1636, %v1704
          %v1737 = vadd.f32 %v1637, %v1705
          %v1738 = vadd.f32 %v1638, %v1706
          %v1739 = vadd.f32 %v1639, %v1707
          %v1740 = vld [vmem:[%s1239 + $0xf] sm:$0xff]
          %v1741 = vld [vmem:[%s1239 + $0x17] sm:$0xff]
          %v1742 = vld [vmem:[%s1239 + $0x37] sm:$0xff]
          %v1743 = vld [vmem:[%s1239 + $0x3f] sm:$0xff]
          %v1744 = vld [vmem:[%s1239 + $0x5f] sm:$0xff]
          %v1745 = vld [vmem:[%s1239 + $0x67] sm:$0xff]
          %v1746 = vld [vmem:[%s1239 + $0x87] sm:$0xff]
          %v1747 = vld [vmem:[%s1239 + $0x8f] sm:$0xff]
          %v1748 = vld [vmem:[%s1239 + $0xaf] sm:$0xff]
          %v1749 = vld [vmem:[%s1239 + $0xb7] sm:$0xff]
          %v1750 = vld [vmem:[%s1239 + $0xd7] sm:$0xff]
          %v1751 = vld [vmem:[%s1239 + $0xdf] sm:$0xff]
          %v1752 = vld [vmem:[%s1239 + $0xff] sm:$0xff]
          %v1753 = vld [vmem:[%s1239 + $0x107] sm:$0xff]
          %v1754 = vld [vmem:[%s1239 + $0x127] sm:$0xff]
          %v1755 = vld [vmem:[%s1239 + $0x12f] sm:$0xff]
          %v1756 = vld [vmem:[%s1239 + $0x14f] sm:$0xff]
          %v1757 = vld [vmem:[%s1239 + $0x157] sm:$0xff]
          %v1758 = vld [vmem:[%s1239 + $0x177] sm:$0xff]
          %v1759 = vld [vmem:[%s1239 + $0x17f] sm:$0xff]
          %v1760 = vld [vmem:[%s1239 + $0x19f] sm:$0xff]
          %v1761 = vld [vmem:[%s1239 + $0x1a7] sm:$0xff]
          %v1762 = vld [vmem:[%s1239 + $0x1c7] sm:$0xff]
          %v1763 = vld [vmem:[%s1239 + $0x1cf] sm:$0xff]
          %v1764 = vld [vmem:[%s1239 + $0x1ef] sm:$0xff]
          %v1765 = vld [vmem:[%s1239 + $0x1f7] sm:$0xff]
          %v1766 = vld [vmem:[%s1239 + $0x217] sm:$0xff]
          %v1767 = vld [vmem:[%s1239 + $0x21f] sm:$0xff]
          %v1768 = vld [vmem:[%s1239 + $0x23f] sm:$0xff]
          %v1769 = vld [vmem:[%s1239 + $0x247] sm:$0xff]
          %v1770 = vld [vmem:[%s1239 + $0x267] sm:$0xff]
          %v1771 = vld [vmem:[%s1239 + $0x26f] sm:$0xff]
          %v1772 = vlaneseq
          %v1773 = vshrl.u32 %v1772, 7
          %v1774 = vsub.s32 5, %v1773
          %v1775 = vrot.slane %v1236, %v1774
          %v1776 = vmul.f32 %v1775, %v1740
          %v1777 = vmul.f32 %v1775, %v1741
          %v1778 = vmul.f32 %v1775, %v1742
          %v1779 = vmul.f32 %v1775, %v1743
          %v1780 = vmul.f32 %v1775, %v1744
          %v1781 = vmul.f32 %v1775, %v1745
          %v1782 = vmul.f32 %v1775, %v1746
          %v1783 = vmul.f32 %v1775, %v1747
          %v1784 = vmul.f32 %v1775, %v1748
          %v1785 = vmul.f32 %v1775, %v1749
          %v1786 = vmul.f32 %v1775, %v1750
          %v1787 = vmul.f32 %v1775, %v1751
          %v1788 = vmul.f32 %v1775, %v1752
          %v1789 = vmul.f32 %v1775, %v1753
          %v1790 = vmul.f32 %v1775, %v1754
          %v1791 = vmul.f32 %v1775, %v1755
          %v1792 = vmul.f32 %v1775, %v1756
          %v1793 = vmul.f32 %v1775, %v1757
          %v1794 = vmul.f32 %v1775, %v1758
          %v1795 = vmul.f32 %v1775, %v1759
          %v1796 = vmul.f32 %v1775, %v1760
          %v1797 = vmul.f32 %v1775, %v1761
          %v1798 = vmul.f32 %v1775, %v1762
          %v1799 = vmul.f32 %v1775, %v1763
          %v1800 = vmul.f32 %v1775, %v1764
          %v1801 = vmul.f32 %v1775, %v1765
          %v1802 = vmul.f32 %v1775, %v1766
          %v1803 = vmul.f32 %v1775, %v1767
          %v1804 = vmul.f32 %v1775, %v1768
          %v1805 = vmul.f32 %v1775, %v1769
          %v1806 = vmul.f32 %v1775, %v1770
          %v1807 = vmul.f32 %v1775, %v1771
          %v1808 = vadd.f32 %v1708, %v1776
          %v1809 = vadd.f32 %v1709, %v1777
          %v1810 = vadd.f32 %v1710, %v1778
          %v1811 = vadd.f32 %v1711, %v1779
          %v1812 = vadd.f32 %v1712, %v1780
          %v1813 = vadd.f32 %v1713, %v1781
          %v1814 = vadd.f32 %v1714, %v1782
          %v1815 = vadd.f32 %v1715, %v1783
          %v1816 = vadd.f32 %v1716, %v1784
          %v1817 = vadd.f32 %v1717, %v1785
          %v1818 = vadd.f32 %v1718, %v1786
          %v1819 = vadd.f32 %v1719, %v1787
          %v1820 = vadd.f32 %v1720, %v1788
          %v1821 = vadd.f32 %v1721, %v1789
          %v1822 = vadd.f32 %v1722, %v1790
          %v1823 = vadd.f32 %v1723, %v1791
          %v1824 = vadd.f32 %v1724, %v1792
          %v1825 = vadd.f32 %v1725, %v1793
          %v1826 = vadd.f32 %v1726, %v1794
          %v1827 = vadd.f32 %v1727, %v1795
          %v1828 = vadd.f32 %v1728, %v1796
          %v1829 = vadd.f32 %v1729, %v1797
          %v1830 = vadd.f32 %v1730, %v1798
          %v1831 = vadd.f32 %v1731, %v1799
          %v1832 = vadd.f32 %v1732, %v1800
          %v1833 = vadd.f32 %v1733, %v1801
          %v1834 = vadd.f32 %v1734, %v1802
          %v1835 = vadd.f32 %v1735, %v1803
          %v1836 = vadd.f32 %v1736, %v1804
          %v1837 = vadd.f32 %v1737, %v1805
          %v1838 = vadd.f32 %v1738, %v1806
          %v1839 = vadd.f32 %v1739, %v1807
          %v1840 = vld [vmem:[%s1239 + $0x12] sm:$0xff]
          %v1841 = vld [vmem:[%s1239 + $0x1a] sm:$0xff]
          %v1842 = vld [vmem:[%s1239 + $0x3a] sm:$0xff]
          %v1843 = vld [vmem:[%s1239 + $0x42] sm:$0xff]
          %v1844 = vld [vmem:[%s1239 + $0x62] sm:$0xff]
          %v1845 = vld [vmem:[%s1239 + $0x6a] sm:$0xff]
          %v1846 = vld [vmem:[%s1239 + $0x8a] sm:$0xff]
          %v1847 = vld [vmem:[%s1239 + $0x92] sm:$0xff]
          %v1848 = vld [vmem:[%s1239 + $0xb2] sm:$0xff]
          %v1849 = vld [vmem:[%s1239 + $0xba] sm:$0xff]
          %v1850 = vld [vmem:[%s1239 + $0xda] sm:$0xff]
          %v1851 = vld [vmem:[%s1239 + $0xe2] sm:$0xff]
          %v1852 = vld [vmem:[%s1239 + $0x102] sm:$0xff]
          %v1853 = vld [vmem:[%s1239 + $0x10a] sm:$0xff]
          %v1854 = vld [vmem:[%s1239 + $0x12a] sm:$0xff]
          %v1855 = vld [vmem:[%s1239 + $0x132] sm:$0xff]
          %v1856 = vld [vmem:[%s1239 + $0x152] sm:$0xff]
          %v1857 = vld [vmem:[%s1239 + $0x15a] sm:$0xff]
          %v1858 = vld [vmem:[%s1239 + $0x17a] sm:$0xff]
          %v1859 = vld [vmem:[%s1239 + $0x182] sm:$0xff]
          %v1860 = vld [vmem:[%s1239 + $0x1a2] sm:$0xff]
          %v1861 = vld [vmem:[%s1239 + $0x1aa] sm:$0xff]
          %v1862 = vld [vmem:[%s1239 + $0x1ca] sm:$0xff]
          %v1863 = vld [vmem:[%s1239 + $0x1d2] sm:$0xff]
          %v1864 = vld [vmem:[%s1239 + $0x1f2] sm:$0xff]
          %v1865 = vld [vmem:[%s1239 + $0x1fa] sm:$0xff]
          %v1866 = vld [vmem:[%s1239 + $0x21a] sm:$0xff]
          %v1867 = vld [vmem:[%s1239 + $0x222] sm:$0xff]
          %v1868 = vld [vmem:[%s1239 + $0x242] sm:$0xff]
          %v1869 = vld [vmem:[%s1239 + $0x24a] sm:$0xff]
          %v1870 = vld [vmem:[%s1239 + $0x26a] sm:$0xff]
          %v1871 = vld [vmem:[%s1239 + $0x272] sm:$0xff]
          %v1872 = vlaneseq
          %v1873 = vshrl.u32 %v1872, 7
          %v1874 = vsub.s32 6, %v1873
          %v1875 = vrot.slane %v1236, %v1874
          %v1876 = vmul.f32 %v1875, %v1840
          %v1877 = vmul.f32 %v1875, %v1841
          %v1878 = vmul.f32 %v1875, %v1842
          %v1879 = vmul.f32 %v1875, %v1843
          %v1880 = vmul.f32 %v1875, %v1844
          %v1881 = vmul.f32 %v1875, %v1845
          %v1882 = vmul.f32 %v1875, %v1846
          %v1883 = vmul.f32 %v1875, %v1847
          %v1884 = vmul.f32 %v1875, %v1848
          %v1885 = vmul.f32 %v1875, %v1849
          %v1886 = vmul.f32 %v1875, %v1850
          %v1887 = vmul.f32 %v1875, %v1851
          %v1888 = vmul.f32 %v1875, %v1852
          %v1889 = vmul.f32 %v1875, %v1853
          %v1890 = vmul.f32 %v1875, %v1854
          %v1891 = vmul.f32 %v1875, %v1855
          %v1892 = vmul.f32 %v1875, %v1856
          %v1893 = vmul.f32 %v1875, %v1857
          %v1894 = vmul.f32 %v1875, %v1858
          %v1895 = vmul.f32 %v1875, %v1859
          %v1896 = vmul.f32 %v1875, %v1860
          %v1897 = vmul.f32 %v1875, %v1861
          %v1898 = vmul.f32 %v1875, %v1862
          %v1899 = vmul.f32 %v1875, %v1863
          %v1900 = vmul.f32 %v1875, %v1864
          %v1901 = vmul.f32 %v1875, %v1865
          %v1902 = vmul.f32 %v1875, %v1866
          %v1903 = vmul.f32 %v1875, %v1867
          %v1904 = vmul.f32 %v1875, %v1868
          %v1905 = vmul.f32 %v1875, %v1869
          %v1906 = vmul.f32 %v1875, %v1870
          %v1907 = vmul.f32 %v1875, %v1871
          %v1908 = vadd.f32 %v1808, %v1876
          %v1909 = vadd.f32 %v1809, %v1877
          %v1910 = vadd.f32 %v1810, %v1878
          %v1911 = vadd.f32 %v1811, %v1879
          %v1912 = vadd.f32 %v1812, %v1880
          %v1913 = vadd.f32 %v1813, %v1881
          %v1914 = vadd.f32 %v1814, %v1882
          %v1915 = vadd.f32 %v1815, %v1883
          %v1916 = vadd.f32 %v1816, %v1884
          %v1917 = vadd.f32 %v1817, %v1885
          %v1918 = vadd.f32 %v1818, %v1886
          %v1919 = vadd.f32 %v1819, %v1887
          %v1920 = vadd.f32 %v1820, %v1888
          %v1921 = vadd.f32 %v1821, %v1889
          %v1922 = vadd.f32 %v1822, %v1890
          %v1923 = vadd.f32 %v1823, %v1891
          %v1924 = vadd.f32 %v1824, %v1892
          %v1925 = vadd.f32 %v1825, %v1893
          %v1926 = vadd.f32 %v1826, %v1894
          %v1927 = vadd.f32 %v1827, %v1895
          %v1928 = vadd.f32 %v1828, %v1896
          %v1929 = vadd.f32 %v1829, %v1897
          %v1930 = vadd.f32 %v1830, %v1898
          %v1931 = vadd.f32 %v1831, %v1899
          %v1932 = vadd.f32 %v1832, %v1900
          %v1933 = vadd.f32 %v1833, %v1901
          %v1934 = vadd.f32 %v1834, %v1902
          %v1935 = vadd.f32 %v1835, %v1903
          %v1936 = vadd.f32 %v1836, %v1904
          %v1937 = vadd.f32 %v1837, %v1905
          %v1938 = vadd.f32 %v1838, %v1906
          %v1939 = vadd.f32 %v1839, %v1907
        $region76: #{tpu_custom_call.1} parent=47 // loop_footer
          %s1201 = sadd.s32 1, %s1197
        $region77: #{tpu_custom_call.1} parent=47 // loop_footer_branch
          %1196 = sbr.rel target = $region73
        $region78: #{tpu_custom_call.1} parent=47 // loop_exit
          _
        %v1940 = vld [vmem:[#allocation10] sm:$0xff]
        %v1941 = vld [vmem:[#allocation10 + $0x8] sm:$0xff]
        %v1942 = vld [vmem:[#allocation10 + $0x10] sm:$0xff]
        %v1943 = vld [vmem:[#allocation10 + $0x18] sm:$0xff]
        %v1944 = vld [vmem:[#allocation10 + $0x20] sm:$0xff]
        %v1945 = vld [vmem:[#allocation10 + $0x28] sm:$0xff]
        %v1946 = vld [vmem:[#allocation10 + $0x30] sm:$0xff]
        %v1947 = vld [vmem:[#allocation10 + $0x38] sm:$0xff]
        %v1948 = vld [vmem:[#allocation10 + $0x40] sm:$0xff]
        %v1949 = vld [vmem:[#allocation10 + $0x48] sm:$0xff]
        %v1950 = vld [vmem:[#allocation10 + $0x50] sm:$0xff]
        %v1951 = vld [vmem:[#allocation10 + $0x58] sm:$0xff]
        %v1952 = vld [vmem:[#allocation10 + $0x60] sm:$0xff]
        %v1953 = vld [vmem:[#allocation10 + $0x68] sm:$0xff]
        %v1954 = vld [vmem:[#allocation10 + $0x70] sm:$0xff]
        %v1955 = vld [vmem:[#allocation10 + $0x78] sm:$0xff]
        %v1956 = vld [vmem:[%s6] sm:$0x1]
        %v1958 = vlaneseq
        %v1959 = vshrl.u32 %v1958, 7
        %v1960 = vsub.s32 0, %v1959
        %v1961 = vrot.slane %v1956, %v1960
        %1963 = vmatprep.subr.mxu0 0.0
        %1964 = vmatpush1.msra.mxu0 %v1940
        %1965 = vmatprep.subr.mxu0 0.0
        %1966 = vmatpush1.msra.mxu0 %v1941
        %1967 = vmatprep.subr.mxu0 0.0
        %1968 = vmatpush1.msra.mxu0 %v1942
        %1969 = vmatprep.subr.mxu0 0.0
        %1970 = vmatpush1.msra.mxu0 %v1943
        %1971 = vmatprep.subr.mxu0 0.0
        %1972 = vmatpush1.msra.mxu0 %v1944
        %1973 = vmatprep.subr.mxu0 0.0
        %1974 = vmatpush1.msra.mxu0 %v1945
        %1975 = vmatprep.subr.mxu0 0.0
        %1976 = vmatpush1.msra.mxu0 %v1946
        %1977 = vmatprep.subr.mxu0 0.0
        %1978 = vmatpush1.msra.mxu0 %v1947
        %1979 = vmatprep.subr.mxu0 0.0
        %1980 = vmatpush1.msra.mxu0 %v1948
        %1981 = vmatprep.subr.mxu0 0.0
        %1982 = vmatpush1.msra.mxu0 %v1949
        %1983 = vmatprep.subr.mxu0 0.0
        %1984 = vmatpush1.msra.mxu0 %v1950
        %1985 = vmatprep.subr.mxu0 0.0
        %1986 = vmatpush1.msra.mxu0 %v1951
        %1987 = vmatprep.subr.mxu0 0.0
        %1988 = vmatpush1.msra.mxu0 %v1952
        %1989 = vmatprep.subr.mxu0 0.0
        %1990 = vmatpush1.msra.mxu0 %v1953
        %1991 = vmatprep.subr.mxu0 0.0
        %1992 = vmatpush1.msra.mxu0 %v1954
        %1993 = vmatprep.subr.mxu0 0.0
        %1994 = vmatpush1.msra.mxu0 %v1955
        %1995 = vmatprep.subr.mxu0 0.0
        %1996 = vmatpush1.msra.mxu0 0.0
        %1997 = vmatprep.subr.mxu0 0.0
        %1998 = vmatpush1.msra.mxu0 0.0
        %1999 = vmatprep.subr.mxu0 0.0
        %2000 = vmatpush1.msra.mxu0 0.0
        %2001 = vmatprep.subr.mxu0 0.0
        %2002 = vmatpush1.msra.mxu0 0.0
        %2003 = vmatprep.subr.mxu0 0.0
        %2004 = vmatpush1.msra.mxu0 0.0
        %2005 = vmatprep.subr.mxu0 0.0
        %2006 = vmatpush1.msra.mxu0 0.0
        %2007 = vmatprep.subr.mxu0 0.0
        %2008 = vmatpush1.msra.mxu0 0.0
        %2009 = vmatprep.subr.mxu0 0.0
        %2010 = vmatpush1.msra.mxu0 0.0
        %2011 = vmatprep.subr.mxu0 0.0
        %2012 = vmatpush1.msra.mxu0 0.0
        %2013 = vmatprep.subr.mxu0 0.0
        %2014 = vmatpush1.msra.mxu0 0.0
        %2015 = vmatprep.subr.mxu0 0.0
        %2016 = vmatpush1.msra.mxu0 0.0
        %2017 = vmatprep.subr.mxu0 0.0
        %2018 = vmatpush1.msra.mxu0 0.0
        %2019 = vmatprep.subr.mxu0 0.0
        %2020 = vmatpush1.msra.mxu0 0.0
        %2021 = vmatprep.subr.mxu0 0.0
        %2022 = vmatpush1.msra.mxu0 0.0
        %2023 = vmatprep.subr.mxu0 0.0
        %2024 = vmatpush1.msra.mxu0 0.0
        %2025 = vmatprep.subr.mxu0 0.0
        %2026 = vmatpush1.msra.mxu0 0.0
        %2027 = vmatprep.mubr.f32.mxu0 0.0
        %2028 = vmatmul.mubr.f32.gmra.mrb[0].mxu0 %v1202
        %v2029 = vpop.f32.mrb[0].mxu0
        %v2030 = vadd.f32 %v1961, %v2029
        %v2031 = vpop.f32.mrb[0].mxu0
        %2032 = vmatprep.mubr.f32.mxu0 0.0
        %2033 = vmatmul.mubr.f32.gmra.mrb[0].mxu0 %v1203
        %v2034 = vpop.f32.mrb[0].mxu0
        %v2035 = vadd.f32 %v1961, %v2034
        %v2036 = vpop.f32.mrb[0].mxu0
        %2037 = vmatprep.mubr.f32.mxu0 0.0
        %2038 = vmatmul.mubr.f32.gmra.mrb[0].mxu0 %v1204
        %v2039 = vpop.f32.mrb[0].mxu0
        %v2040 = vadd.f32 %v1961, %v2039
        %v2041 = vpop.f32.mrb[0].mxu0
        %2042 = vmatprep.mubr.f32.mxu0 0.0
        %2043 = vmatmul.mubr.f32.gmra.mrb[0].mxu0 %v1205
        %v2044 = vpop.f32.mrb[0].mxu0
        %v2045 = vadd.f32 %v1961, %v2044
        %v2046 = vpop.f32.mrb[0].mxu0
        %2047 = vmatprep.mubr.f32.mxu0 0.0
        %2048 = vmatmul.mubr.f32.gmra.mrb[0].mxu0 %v1206
        %v2049 = vpop.f32.mrb[0].mxu0
        %v2050 = vadd.f32 %v1961, %v2049
        %v2051 = vpop.f32.mrb[0].mxu0
        %2052 = vmatprep.mubr.f32.mxu0 0.0
        %2053 = vmatmul.mubr.f32.gmra.mrb[0].mxu0 %v1207
        %v2054 = vpop.f32.mrb[0].mxu0
        %v2055 = vadd.f32 %v1961, %v2054
        %v2056 = vpop.f32.mrb[0].mxu0
        %2057 = vmatprep.mubr.f32.mxu0 0.0
        %2058 = vmatmul.mubr.f32.gmra.mrb[0].mxu0 %v1208
        %v2059 = vpop.f32.mrb[0].mxu0
        %v2060 = vadd.f32 %v1961, %v2059
        %v2061 = vpop.f32.mrb[0].mxu0
        %2062 = vmatprep.mubr.f32.mxu0 0.0
        %2063 = vmatmul.mubr.f32.gmra.mrb[0].mxu0 %v1209
        %v2064 = vpop.f32.mrb[0].mxu0
        %v2065 = vadd.f32 %v1961, %v2064
        %v2066 = vpop.f32.mrb[0].mxu0
        %2067 = vmatprep.mubr.f32.mxu0 0.0
        %2068 = vmatmul.mubr.f32.gmra.mrb[0].mxu0 %v1210
        %v2069 = vpop.f32.mrb[0].mxu0
        %v2070 = vadd.f32 %v1961, %v2069
        %v2071 = vpop.f32.mrb[0].mxu0
        %2072 = vmatprep.mubr.f32.mxu0 0.0
        %2073 = vmatmul.mubr.f32.gmra.mrb[0].mxu0 %v1211
        %v2074 = vpop.f32.mrb[0].mxu0
        %v2075 = vadd.f32 %v1961, %v2074
        %v2076 = vpop.f32.mrb[0].mxu0
        %2077 = vmatprep.mubr.f32.mxu0 0.0
        %2078 = vmatmul.mubr.f32.gmra.mrb[0].mxu0 %v1212
        %v2079 = vpop.f32.mrb[0].mxu0
        %v2080 = vadd.f32 %v1961, %v2079
        %v2081 = vpop.f32.mrb[0].mxu0
        %2082 = vmatprep.mubr.f32.mxu0 0.0
        %2083 = vmatmul.mubr.f32.gmra.mrb[0].mxu0 %v1213
        %v2084 = vpop.f32.mrb[0].mxu0
        %v2085 = vadd.f32 %v1961, %v2084
        %v2086 = vpop.f32.mrb[0].mxu0
        %2087 = vmatprep.mubr.f32.mxu0 0.0
        %2088 = vmatmul.mubr.f32.gmra.mrb[0].mxu0 %v1214
        %v2089 = vpop.f32.mrb[0].mxu0
        %v2090 = vadd.f32 %v1961, %v2089
        %v2091 = vpop.f32.mrb[0].mxu0
        %2092 = vmatprep.mubr.f32.mxu0 0.0
        %2093 = vmatmul.mubr.f32.gmra.mrb[0].mxu0 %v1215
        %v2094 = vpop.f32.mrb[0].mxu0
        %v2095 = vadd.f32 %v1961, %v2094
        %v2096 = vpop.f32.mrb[0].mxu0
        %2097 = vmatprep.mubr.f32.mxu0 0.0
        %2098 = vmatmul.mubr.f32.gmra.mrb[0].mxu0 %v1216
        %v2099 = vpop.f32.mrb[0].mxu0
        %v2100 = vadd.f32 %v1961, %v2099
        %v2101 = vpop.f32.mrb[0].mxu0
        %2102 = vmatprep.mubr.f32.mxu0 0.0
        %2103 = vmatmul.mubr.f32.gmra.mrb[0].mxu0 %v1217
        %v2104 = vpop.f32.mrb[0].mxu0
        %v2105 = vadd.f32 %v1961, %v2104
        %v2106 = vpop.f32.mrb[0].mxu0
        %2107 = vmatprep.mubr.f32.mxu0 0.0
        %2108 = vmatmul.mubr.f32.gmra.mrb[0].mxu0 %v1218
        %v2109 = vpop.f32.mrb[0].mxu0
        %v2110 = vadd.f32 %v1961, %v2109
        %v2111 = vpop.f32.mrb[0].mxu0
        %2112 = vmatprep.mubr.f32.mxu0 0.0
        %2113 = vmatmul.mubr.f32.gmra.mrb[0].mxu0 %v1219
        %v2114 = vpop.f32.mrb[0].mxu0
        %v2115 = vadd.f32 %v1961, %v2114
        %v2116 = vpop.f32.mrb[0].mxu0
        %2117 = vmatprep.mubr.f32.mxu0 0.0
        %2118 = vmatmul.mubr.f32.gmra.mrb[0].mxu0 %v1220
        %v2119 = vpop.f32.mrb[0].mxu0
        %v2120 = vadd.f32 %v1961, %v2119
        %v2121 = vpop.f32.mrb[0].mxu0
        %2122 = vmatprep.mubr.f32.mxu0 0.0
        %2123 = vmatmul.mubr.f32.gmra.mrb[0].mxu0 %v1221
        %v2124 = vpop.f32.mrb[0].mxu0
        %v2125 = vadd.f32 %v1961, %v2124
        %v2126 = vpop.f32.mrb[0].mxu0
        %2127 = vmatprep.mubr.f32.mxu0 0.0
        %2128 = vmatmul.mubr.f32.gmra.mrb[0].mxu0 %v1222
        %v2129 = vpop.f32.mrb[0].mxu0
        %v2130 = vadd.f32 %v1961, %v2129
        %v2131 = vpop.f32.mrb[0].mxu0
        %2132 = vmatprep.mubr.f32.mxu0 0.0
        %2133 = vmatmul.mubr.f32.gmra.mrb[0].mxu0 %v1223
        %v2134 = vpop.f32.mrb[0].mxu0
        %v2135 = vadd.f32 %v1961, %v2134
        %v2136 = vpop.f32.mrb[0].mxu0
        %2137 = vmatprep.mubr.f32.mxu0 0.0
        %2138 = vmatmul.mubr.f32.gmra.mrb[0].mxu0 %v1224
        %v2139 = vpop.f32.mrb[0].mxu0
        %v2140 = vadd.f32 %v1961, %v2139
        %v2141 = vpop.f32.mrb[0].mxu0
        %2142 = vmatprep.mubr.f32.mxu0 0.0
        %2143 = vmatmul.mubr.f32.gmra.mrb[0].mxu0 %v1225
        %v2144 = vpop.f32.mrb[0].mxu0
        %v2145 = vadd.f32 %v1961, %v2144
        %v2146 = vpop.f32.mrb[0].mxu0
        %2147 = vmatprep.mubr.f32.mxu0 0.0
        %2148 = vmatmul.mubr.f32.gmra.mrb[0].mxu0 %v1226
        %v2149 = vpop.f32.mrb[0].mxu0
        %v2150 = vadd.f32 %v1961, %v2149
        %v2151 = vpop.f32.mrb[0].mxu0
        %2152 = vmatprep.mubr.f32.mxu0 0.0
        %2153 = vmatmul.mubr.f32.gmra.mrb[0].mxu0 %v1227
        %v2154 = vpop.f32.mrb[0].mxu0
        %v2155 = vadd.f32 %v1961, %v2154
        %v2156 = vpop.f32.mrb[0].mxu0
        %2157 = vmatprep.mubr.f32.mxu0 0.0
        %2158 = vmatmul.mubr.f32.gmra.mrb[0].mxu0 %v1228
        %v2159 = vpop.f32.mrb[0].mxu0
        %v2160 = vadd.f32 %v1961, %v2159
        %v2161 = vpop.f32.mrb[0].mxu0
        %2162 = vmatprep.mubr.f32.mxu0 0.0
        %2163 = vmatmul.mubr.f32.gmra.mrb[0].mxu0 %v1229
        %v2164 = vpop.f32.mrb[0].mxu0
        %v2165 = vadd.f32 %v1961, %v2164
        %v2166 = vpop.f32.mrb[0].mxu0
        %2167 = vmatprep.mubr.f32.mxu0 0.0
        %2168 = vmatmul.mubr.f32.gmra.mrb[0].mxu0 %v1230
        %v2169 = vpop.f32.mrb[0].mxu0
        %v2170 = vadd.f32 %v1961, %v2169
        %v2171 = vpop.f32.mrb[0].mxu0
        %2172 = vmatprep.mubr.f32.mxu0 0.0
        %2173 = vmatmul.mubr.f32.gmra.mrb[0].mxu0 %v1231
        %v2174 = vpop.f32.mrb[0].mxu0
        %v2175 = vadd.f32 %v1961, %v2174
        %v2176 = vpop.f32.mrb[0].mxu0
        %2177 = vmatprep.mubr.f32.mxu0 0.0
        %2178 = vmatmul.mubr.f32.gmra.mrb[0].mxu0 %v1232
        %v2179 = vpop.f32.mrb[0].mxu0
        %v2180 = vadd.f32 %v1961, %v2179
        %v2181 = vpop.f32.mrb[0].mxu0
        %2182 = vmatprep.mubr.f32.mxu0 0.0
        %2183 = vmatmul.mubr.f32.gmra.mrb[0].mxu0 %v1233
        %v2184 = vpop.f32.mrb[0].mxu0
        %v2185 = vadd.f32 %v1961, %v2184
        %v2186 = vpop.f32.mrb[0].mxu0
        %2187 = vdwg.mxu0
        %v2188 = vmul.f32 %v341, %v2030
        %v2189 = vmul.f32 %v342, %v2035
        %v2190 = vmul.f32 %v343, %v2040
        %v2191 = vmul.f32 %v344, %v2045
        %v2192 = vmul.f32 %v345, %v2050
        %v2193 = vmul.f32 %v346, %v2055
        %v2194 = vmul.f32 %v347, %v2060
        %v2195 = vmul.f32 %v348, %v2065
        %v2196 = vmul.f32 %v349, %v2070
        %v2197 = vmul.f32 %v350, %v2075
        %v2198 = vmul.f32 %v351, %v2080
        %v2199 = vmul.f32 %v352, %v2085
        %v2200 = vmul.f32 %v353, %v2090
        %v2201 = vmul.f32 %v354, %v2095
        %v2202 = vmul.f32 %v355, %v2100
        %v2203 = vmul.f32 %v356, %v2105
        %v2204 = vmul.f32 %v357, %v2110
        %v2205 = vmul.f32 %v358, %v2115
        %v2206 = vmul.f32 %v359, %v2120
        %v2207 = vmul.f32 %v360, %v2125
        %v2208 = vmul.f32 %v361, %v2130
        %v2209 = vmul.f32 %v362, %v2135
        %v2210 = vmul.f32 %v363, %v2140
        %v2211 = vmul.f32 %v364, %v2145
        %v2212 = vmul.f32 %v365, %v2150
        %v2213 = vmul.f32 %v366, %v2155
        %v2214 = vmul.f32 %v367, %v2160
        %v2215 = vmul.f32 %v368, %v2165
        %v2216 = vmul.f32 %v369, %v2170
        %v2217 = vmul.f32 %v370, %v2175
        %v2218 = vmul.f32 %v371, %v2180
        %v2219 = vmul.f32 %v372, %v2185
        %2220 = vst [vmem:[%s340] sm:$0xff] %v2188
        %2221 = vst [vmem:[%s340 + $0x8] sm:$0xff] %v2189
        %2222 = vst [vmem:[%s340 + $0x10] sm:$0xff] %v2190
        %2223 = vst [vmem:[%s340 + $0x18] sm:$0xff] %v2191
        %2224 = vst [vmem:[%s340 + $0x20] sm:$0xff] %v2192
        %2225 = vst [vmem:[%s340 + $0x28] sm:$0xff] %v2193
        %2226 = vst [vmem:[%s340 + $0x30] sm:$0xff] %v2194
        %2227 = vst [vmem:[%s340 + $0x38] sm:$0xff] %v2195
        %2228 = vst [vmem:[%s340 + $0x40] sm:$0xff] %v2196
        %2229 = vst [vmem:[%s340 + $0x48] sm:$0xff] %v2197
        %2230 = vst [vmem:[%s340 + $0x50] sm:$0xff] %v2198
        %2231 = vst [vmem:[%s340 + $0x58] sm:$0xff] %v2199
        %2232 = vst [vmem:[%s340 + $0x60] sm:$0xff] %v2200
        %2233 = vst [vmem:[%s340 + $0x68] sm:$0xff] %v2201
        %2234 = vst [vmem:[%s340 + $0x70] sm:$0xff] %v2202
        %2235 = vst [vmem:[%s340 + $0x78] sm:$0xff] %v2203
        %2236 = vst [vmem:[%s340 + $0x80] sm:$0xff] %v2204
        %2237 = vst [vmem:[%s340 + $0x88] sm:$0xff] %v2205
        %2238 = vst [vmem:[%s340 + $0x90] sm:$0xff] %v2206
        %2239 = vst [vmem:[%s340 + $0x98] sm:$0xff] %v2207
        %2240 = vst [vmem:[%s340 + $0xa0] sm:$0xff] %v2208
        %2241 = vst [vmem:[%s340 + $0xa8] sm:$0xff] %v2209
        %2242 = vst [vmem:[%s340 + $0xb0] sm:$0xff] %v2210
        %2243 = vst [vmem:[%s340 + $0xb8] sm:$0xff] %v2211
        %2244 = vst [vmem:[%s340 + $0xc0] sm:$0xff] %v2212
        %2245 = vst [vmem:[%s340 + $0xc8] sm:$0xff] %v2213
        %2246 = vst [vmem:[%s340 + $0xd0] sm:$0xff] %v2214
        %2247 = vst [vmem:[%s340 + $0xd8] sm:$0xff] %v2215
        %2248 = vst [vmem:[%s340 + $0xe0] sm:$0xff] %v2216
        %2249 = vst [vmem:[%s340 + $0xe8] sm:$0xff] %v2217
        %2250 = vst [vmem:[%s340 + $0xf0] sm:$0xff] %v2218
        %2251 = vst [vmem:[%s340 + $0xf8] sm:$0xff] %v2219
        %s2252 = sand.u32 %s186, 1
        %s2253 = scalar_lea.sflag [#allocation6], %s2252
        %s2254 = sand.u32 %s186, 1
        %s2255 = smul.addr %s2254, 256
        %s2256 = scalar_lea.vmem [#allocation12], %s2255
        // Predicated region
        $region79: #{tpu_custom_call.1} parent=47 // pred_check
          %p2257 = pneg %p196
        $region80: #{tpu_custom_call.1} parent=47 // pred_check_branch
          %2259 = sbr.rel (%p2257) target = $region82
        $region81: #{tpu_custom_call.1} parent=47 // pred_region
          %s2261 = ssub.s32 4096, 4096
          %2262 = vsyncadd %s2253, %s2261
          %s2263 = smul.addr %s26, 32
          %s2264 = smul.addr %s2263, 128
          %s2265 = scalar_lea.hbm %s7, %s2264
          %s2266 = sshll.u32 %s2256, 4
          %s2267 = int_to_ptr.vmem [resolvable:$true] %s2266
          %2272 = dma.vmem_to_hbm [thread:$0]  %s2267, 4096, %s2265, %s2253, 128, 128, 8
        $region82: #{tpu_custom_call.1} parent=47 // pred_fallthru
          _
      $region48: #{tpu_custom_call.1} parent=5 // pred_fallthru
        _
      %p2273 = scmp.le.s32.totalorder 2, %s21
      // Predicated region
      $region83: #{tpu_custom_call.1} parent=5 // pred_check
        %p2274 = pneg %p2273
      $region84: #{tpu_custom_call.1} parent=5 // pred_check_branch
        %2276 = sbr.rel (%p2274) target = $region86
      $region85: #{tpu_custom_call.1} parent=5 // pred_region
        %s2277 = ssub.s32 %s21, 2
        // Predicated region
        $region87: #{tpu_custom_call.1} parent=85 // pred_check
          %p2278 = pneg %p202
        $region88: #{tpu_custom_call.1} parent=85 // pred_check_branch
          %2280 = sbr.rel (%p2278) target = $region90
        $region89: #{tpu_custom_call.1} parent=85 // pred_region
          %s2281 = sand.u32 %s187, 1
          %s2282 = scalar_lea.sflag [#allocation6], %s2281
          %s2283 = sand.u32 %s187, 1
          %s2284 = smul.addr %s2283, 256
          %s2285 = scalar_lea.vmem [#allocation12], %s2284
          %2286 = dma.done %s2282, 4096
        $region90: #{tpu_custom_call.1} parent=85 // pred_fallthru
          _
      $region86: #{tpu_custom_call.1} parent=5 // pred_fallthru
        _
    $region6: #{tpu_custom_call.1} parent=1 // loop_footer
      %s25 = sadd.s32 1, %s21
    $region7: #{tpu_custom_call.1} parent=1 // loop_footer_branch
      %20 = sbr.rel target = $region3
    $region8: #{tpu_custom_call.1} parent=1 // loop_exit
      _
    %2287 = vsyncpa [#allocation5], 1
    %s2288 = scalar_lea.sflag [#allocation5], 1
    %2289 = vsyncpa %s2288, 1
    %2290 = vsyncpa [#allocation8], 1
    %2291 = vsyncpa [#allocation11], 1
    %2292 = vsyncpa [#allocation6], 1
    %s2293 = scalar_lea.sflag [#allocation6], 1
    %2294 = vsyncpa %s2293, 1

</llo_original>
